<compile_context>
chip_gen: v5e
topology: v5e:2x2
jax: 0.10.0
libtpu: 0.0.40
codegen_flags: <defaults>
</compile_context>

<pallas_src>
import math

import jax
import jax.numpy as jnp
from jax.experimental import pallas as pl
from jax.experimental.pallas import tpu as pltpu


# ----------------------------------------------------------------------------------------------
# Kernel
# ----------------------------------------------------------------------------------------------
def _mlp_kernel(x_ref, w1, w2, w3, w4, w5, w6, b_ref, o_ref):
    """One batch tile of the fused 6-layer MLP.

    x_ref:  (TM, IN_P)  f32   -- batch tile (lane-dense padded input features)
    w1..w6: padded bf16 weights, VMEM-resident across the whole batch loop
    b_ref:  (8, HID_P)  f32   -- rows 0..5 hold the 6 bias vectors
    o_ref:  (TM, 128)   f32   -- lane-dense padded output (column 0 is the real output)
    """
    h = x_ref[...].astype(jnp.bfloat16)
    weights = (w1, w2, w3, w4, w5, w6)
    for i, w in enumerate(weights):  # static python loop -> fully unrolled at trace time
        acc = jnp.dot(h, w[...], preferred_element_type=jnp.float32)
        bias = b_ref[i:i + 1, :acc.shape[1]]          # (1, width) f32, broadcasts over rows
        acc = acc + bias
        if i < 5:
            # fused ReLU + bf16 downcast: only a bf16 activation stays live between layers
            h = jnp.maximum(acc, 0.0).astype(jnp.bfloat16)
        else:
            o_ref[...] = acc                          # (TM, 128) lane-dense unmasked store


# ----------------------------------------------------------------------------------------------
# Helpers
# ----------------------------------------------------------------------------------------------
def _round_up(n, m):
    return ((n + m - 1) // m) * m


def _vmem_cap_bytes():
    """Generation-aware usable-VMEM cap: physical capacity minus ~25% compiler headroom."""
    phys = 64 * 1024 * 1024  # conservative default (v7x per-TC VMEM)
    try:
        info = pltpu.get_tpu_info()
        phys = int(info.vmem_capacity_bytes)
    except Exception:
        pass
    return max(16 * 1024 * 1024, int(phys * 3 // 4))


def _choose_tm(batch, weight_bytes, in_p, hid_p, out_p, vmem_cap, max_block_batch):
    """Pick the batch tile: minimize padding waste, prefer >=2 (even) grid steps, prefer big tiles."""
    candidates = [t for t in (1024, 512, 256, 128) if t <= max_block_batch]
    small = _round_up(batch, 8)
    if small < 128:
        candidates.append(small)
    if not candidates:
        candidates = [small]

    best_key, best_tm = None, None
    for tm in candidates:
        io_bytes = 2 * (tm * in_p * 4 + tm * out_p * 4)   # double-buffered x/out tiles
        act_bytes = 3 * tm * hid_p * 4                    # live matmul intermediates
        need = weight_bytes + io_bytes + act_bytes
        if need > vmem_cap:
            continue
        batch_p = _round_up(batch, tm)
        steps = batch_p // tm
        waste = batch_p - batch
        key = (waste,                      # minimal batch-padding waste (MXU work is 1:1)
               0 if steps >= 2 else 1,     # >=2 steps so both v7x TensorCores get work
               0 if steps % 2 == 0 else 1,  # prefer an even step count
               -tm)                        # then the largest tile (amortize per-step overhead)
        if best_key is None or key < best_key:
            best_key, best_tm = key, tm
    return best_tm if best_tm is not None else min(candidates)


# ----------------------------------------------------------------------------------------------
# Parameter preparation (hoisted out of the forward: run once)
# ----------------------------------------------------------------------------------------------
def prepare_deepnet_params(params):
    """Pad + cast weights to bf16 and pack biases once.

    params: list of 6 (W, b), W shape (in, out), b shape (1, out).
    Returns (weights_bf16_tuple, bias_pack, meta).
    """
    in_dim = params[0][0].shape[0]
    hidden = params[0][0].shape[1]
    in_p = _round_up(in_dim, 128)
    hid_p = _round_up(hidden, 128)
    out_p = 128

    dims_in = [in_p] + [hid_p] * 5
    dims_out = [hid_p] * 5 + [out_p]

    weights = []
    bias_pack = jnp.zeros((8, hid_p), jnp.float32)
    for i, (w, b) in enumerate(params):
        wi, wo = w.shape
        wp = (jnp.zeros((dims_in[i], dims_out[i]), jnp.float32)
              .at[:wi, :wo].set(w.astype(jnp.float32))
              .astype(jnp.bfloat16))
        weights.append(wp)
        bias_pack = bias_pack.at[i, :wo].set(b.reshape(-1).astype(jnp.float32))

    meta = dict(in_dim=in_dim, hidden=hidden, in_p=in_p, hid_p=hid_p, out_p=out_p)
    return tuple(weights), bias_pack, meta


# ----------------------------------------------------------------------------------------------
# Forward
# ----------------------------------------------------------------------------------------------
def deepnet_forward(x, prepared, *, max_block_batch=1024):
    """x: (batch, input_dim) -> (batch, 1) f32.  `prepared` from prepare_deepnet_params()."""
    weights, bias_pack, meta = prepared
    batch = x.shape[0]
    in_dim, in_p = meta["in_dim"], meta["in_p"]
    hid_p, out_p = meta["hid_p"], meta["out_p"]

    weight_bytes = sum(int(w.size) * w.dtype.itemsize for w in weights)
    weight_bytes += int(bias_pack.size) * 4

    vmem_cap = _vmem_cap_bytes()
    tm = _choose_tm(batch, weight_bytes, in_p, hid_p, out_p, vmem_cap, max_block_batch)
    batch_p = _round_up(batch, tm)
    steps = batch_p // tm

    # Pad input (lane-dense); zero padding is numerically inert and sliced off at the end.
    xp = jnp.zeros((batch_p, in_p), jnp.float32).at[:batch, :in_dim].set(
        x.astype(jnp.float32))

    # Scheduler hints (padded FLOPs/bytes — advisory only).
    flops = 2 * batch_p * (in_p * hid_p + 4 * hid_p * hid_p + hid_p * out_p)
    bytes_accessed = int(xp.size) * 4 + weight_bytes + batch_p * out_p * 4
    cost = pl.CostEstimate(flops=int(flops), transcendentals=0,
                           bytes_accessed=int(bytes_accessed))

    # VMEM budget (conservative: covers the double-buffered fallback too), generation-capped.
    io_bytes = 2 * (tm * in_p * 4 + tm * out_p * 4)
    act_bytes = 3 * tm * hid_p * 4
    vmem_need = 2 * weight_bytes + io_bytes + act_bytes + (4 << 20)
    vmem_limit = int(min(max(vmem_need, 32 * 1024 * 1024), vmem_cap))

    def _build_and_call(single_buffer_weights):
        def resident_spec(shape):
            if single_buffer_weights:
                return pl.BlockSpec(shape, lambda i: (0, 0),
                                    pipeline_mode=pl.Buffered(1))
            return pl.BlockSpec(shape, lambda i: (0, 0))

        in_specs = [pl.BlockSpec((tm, in_p), lambda i: (i, 0))]
        in_specs += [resident_spec(w.shape) for w in weights]
        in_specs.append(resident_spec(bias_pack.shape))
        out_spec = pl.BlockSpec((tm, out_p), lambda i: (i, 0))

        fn = pl.pallas_call(
            _mlp_kernel,
            out_shape=jax.ShapeDtypeStruct((batch_p, out_p), jnp.float32),
            grid=(steps,),
            in_specs=in_specs,
            out_specs=out_spec,
            compiler_params=pltpu.CompilerParams(
                dimension_semantics=("parallel",),
                vmem_limit_bytes=vmem_limit,
            ),
            cost_estimate=cost,
        )
        return fn(xp, *weights, bias_pack)

    try:
        out = _build_and_call(True)
    except Exception:
        # Fallback if single-buffered resident inputs are not supported by this compiler build.
        out = _build_and_call(False)

    return out[:batch, :1]


# ----------------------------------------------------------------------------------------------
# Init + reference
# ----------------------------------------------------------------------------------------------
def init_deepnet_params(key, input_dim, hidden_dim):
    """Mirror torch.nn.Linear default init: U(-1/sqrt(fan_in), 1/sqrt(fan_in))."""
    dims = [input_dim] + [hidden_dim] * 5 + [1]
    params = []
    for i in range(6):
        fan_in, fan_out = dims[i], dims[i + 1]
        key, kw, kb = jax.random.split(key, 3)
        bound = 1.0 / math.sqrt(fan_in)
        w = jax.random.uniform(kw, (fan_in, fan_out), jnp.float32, -bound, bound)
        b = jax.random.uniform(kb, (1, fan_out), jnp.float32, -bound, bound)
        params.append((w, b))
    return params


def deepnet_reference(x, params):
    """Pure-JAX reference using the same bf16-weight / f32-accumulate recipe as the kernel."""
    h = x.astype(jnp.float32)
    for i, (w, b) in enumerate(params):
        h = jnp.dot(h.astype(jnp.bfloat16), w.astype(jnp.bfloat16),
                    preferred_element_type=jnp.float32) + b
        if i < 5:
            h = jnp.maximum(h, 0.0)
    return h


if __name__ == "__main__":
    key = jax.random.PRNGKey(0)
    batch = 8
    input_dim = 4
    hidden_dim = 128  # small, lane-aligned stand-in for the default 1000 (which pads to 1024)

    key, kx = jax.random.split(key)
    x = jax.random.normal(kx, (batch, input_dim), jnp.float32)
    params = init_deepnet_params(key, input_dim, hidden_dim)

    prepared = prepare_deepnet_params(params)   # hoisted pad/cast: done once, reused per forward
    out = deepnet_forward(x, prepared)
    out = jax.block_until_ready(out)

    ref = deepnet_reference(x, params)
    assert out.shape == (batch, 1)
    assert jnp.allclose(out, ref, atol=1e-2, rtol=1e-2), "mismatch vs reference"

    print("KERNEL_OK")
</pallas_src>

<mosaic_0001>
module attributes {stable_mosaic.version = 11 : i64} {
  func.func @_mlp_kernel(%arg0: i32, %arg1: memref<8x128xf32, #tpu.memory_space<vmem>>, %arg2: memref<128x128xbf16, #tpu.memory_space<vmem>>, %arg3: memref<128x128xbf16, #tpu.memory_space<vmem>>, %arg4: memref<128x128xbf16, #tpu.memory_space<vmem>>, %arg5: memref<128x128xbf16, #tpu.memory_space<vmem>>, %arg6: memref<128x128xbf16, #tpu.memory_space<vmem>>, %arg7: memref<128x128xbf16, #tpu.memory_space<vmem>>, %arg8: memref<8x128xf32, #tpu.memory_space<vmem>>, %arg9: memref<8x128xf32, #tpu.memory_space<vmem>>) attributes {dimension_semantics = [#tpu.dimension_semantics<parallel>], iteration_bounds = array<i64: 1>, scalar_prefetch = 0 : i64, scratch_operands = 0 : i64, tpu.core_type = #tpu.core_type<tc>, window_params = [{transform_indices = @transform_0, window_bounds = array<i64: 8, 128>}, {pipeline_mode = #tpu.pipeline_mode<synchronous>, transform_indices = @transform_1, window_bounds = array<i64: 128, 128>}, {pipeline_mode = #tpu.pipeline_mode<synchronous>, transform_indices = @transform_2, window_bounds = array<i64: 128, 128>}, {pipeline_mode = #tpu.pipeline_mode<synchronous>, transform_indices = @transform_3, window_bounds = array<i64: 128, 128>}, {pipeline_mode = #tpu.pipeline_mode<synchronous>, transform_indices = @transform_4, window_bounds = array<i64: 128, 128>}, {pipeline_mode = #tpu.pipeline_mode<synchronous>, transform_indices = @transform_5, window_bounds = array<i64: 128, 128>}, {pipeline_mode = #tpu.pipeline_mode<synchronous>, transform_indices = @transform_6, window_bounds = array<i64: 128, 128>}, {pipeline_mode = #tpu.pipeline_mode<synchronous>, transform_indices = @transform_7, window_bounds = array<i64: 8, 128>}, {transform_indices = @transform_8, window_bounds = array<i64: 8, 128>}]} {
    %c0 = arith.constant 0 : index
    %c0_0 = arith.constant 0 : index
    %0 = vector.load %arg1[%c0, %c0_0] : memref<8x128xf32, #tpu.memory_space<vmem>>, vector<8x128xf32>
    %1 = arith.truncf %0 : vector<8x128xf32> to vector<8x128xbf16>
    %c0_1 = arith.constant 0 : index
    %c0_2 = arith.constant 0 : index
    %2 = vector.load %arg2[%c0_1, %c0_2] : memref<128x128xbf16, #tpu.memory_space<vmem>>, vector<128x128xbf16>
    %cst = arith.constant dense<0.000000e+00> : vector<8x128xf32>
    %3 = tpu.matmul %1, %2, %cst {dimension_numbers = #tpu.dot_dimension_numbers<[1], [0], [0], [1], [0, 0, 1, 1], [], []>} : vector<8x128xbf16>, vector<128x128xbf16>, vector<8x128xf32> -> vector<8x128xf32>
    %c0_3 = arith.constant 0 : index
    %c0_4 = arith.constant 0 : index
    %4 = vector.load %arg8[%c0_3, %c0_4] : memref<8x128xf32, #tpu.memory_space<vmem>>, vector<1x128xf32>
    %5 = vector.broadcast %4 : vector<1x128xf32> to vector<8x128xf32>
    %6 = arith.addf %3, %5 : vector<8x128xf32>
    %cst_5 = arith.constant 0.000000e+00 : f32
    %7 = vector.broadcast %cst_5 : f32 to vector<8x128xf32>
    %8 = arith.maximumf %6, %7 : vector<8x128xf32>
    %9 = arith.truncf %8 : vector<8x128xf32> to vector<8x128xbf16>
    %c0_6 = arith.constant 0 : index
    %c0_7 = arith.constant 0 : index
    %10 = vector.load %arg3[%c0_6, %c0_7] : memref<128x128xbf16, #tpu.memory_space<vmem>>, vector<128x128xbf16>
    %cst_8 = arith.constant dense<0.000000e+00> : vector<8x128xf32>
    %11 = tpu.matmul %9, %10, %cst_8 {dimension_numbers = #tpu.dot_dimension_numbers<[1], [0], [0], [1], [0, 0, 1, 1], [], []>} : vector<8x128xbf16>, vector<128x128xbf16>, vector<8x128xf32> -> vector<8x128xf32>
    %c1 = arith.constant 1 : index
    %c0_9 = arith.constant 0 : index
    %12 = vector.load %arg8[%c1, %c0_9] : memref<8x128xf32, #tpu.memory_space<vmem>>, vector<1x128xf32>
    %13 = vector.broadcast %12 : vector<1x128xf32> to vector<8x128xf32>
    %14 = arith.addf %11, %13 : vector<8x128xf32>
    %cst_10 = arith.constant 0.000000e+00 : f32
    %15 = vector.broadcast %cst_10 : f32 to vector<8x128xf32>
    %16 = arith.maximumf %14, %15 : vector<8x128xf32>
    %17 = arith.truncf %16 : vector<8x128xf32> to vector<8x128xbf16>
    %c0_11 = arith.constant 0 : index
    %c0_12 = arith.constant 0 : index
    %18 = vector.load %arg4[%c0_11, %c0_12] : memref<128x128xbf16, #tpu.memory_space<vmem>>, vector<128x128xbf16>
    %cst_13 = arith.constant dense<0.000000e+00> : vector<8x128xf32>
    %19 = tpu.matmul %17, %18, %cst_13 {dimension_numbers = #tpu.dot_dimension_numbers<[1], [0], [0], [1], [0, 0, 1, 1], [], []>} : vector<8x128xbf16>, vector<128x128xbf16>, vector<8x128xf32> -> vector<8x128xf32>
    %c2 = arith.constant 2 : index
    %c0_14 = arith.constant 0 : index
    %20 = vector.load %arg8[%c2, %c0_14] : memref<8x128xf32, #tpu.memory_space<vmem>>, vector<1x128xf32>
    %21 = vector.broadcast %20 : vector<1x128xf32> to vector<8x128xf32>
    %22 = arith.addf %19, %21 : vector<8x128xf32>
    %cst_15 = arith.constant 0.000000e+00 : f32
    %23 = vector.broadcast %cst_15 : f32 to vector<8x128xf32>
    %24 = arith.maximumf %22, %23 : vector<8x128xf32>
    %25 = arith.truncf %24 : vector<8x128xf32> to vector<8x128xbf16>
    %c0_16 = arith.constant 0 : index
    %c0_17 = arith.constant 0 : index
    %26 = vector.load %arg5[%c0_16, %c0_17] : memref<128x128xbf16, #tpu.memory_space<vmem>>, vector<128x128xbf16>
    %cst_18 = arith.constant dense<0.000000e+00> : vector<8x128xf32>
    %27 = tpu.matmul %25, %26, %cst_18 {dimension_numbers = #tpu.dot_dimension_numbers<[1], [0], [0], [1], [0, 0, 1, 1], [], []>} : vector<8x128xbf16>, vector<128x128xbf16>, vector<8x128xf32> -> vector<8x128xf32>
    %c3 = arith.constant 3 : index
    %c0_19 = arith.constant 0 : index
    %28 = vector.load %arg8[%c3, %c0_19] : memref<8x128xf32, #tpu.memory_space<vmem>>, vector<1x128xf32>
    %29 = vector.broadcast %28 : vector<1x128xf32> to vector<8x128xf32>
    %30 = arith.addf %27, %29 : vector<8x128xf32>
    %cst_20 = arith.constant 0.000000e+00 : f32
    %31 = vector.broadcast %cst_20 : f32 to vector<8x128xf32>
    %32 = arith.maximumf %30, %31 : vector<8x128xf32>
    %33 = arith.truncf %32 : vector<8x128xf32> to vector<8x128xbf16>
    %c0_21 = arith.constant 0 : index
    %c0_22 = arith.constant 0 : index
    %34 = vector.load %arg6[%c0_21, %c0_22] : memref<128x128xbf16, #tpu.memory_space<vmem>>, vector<128x128xbf16>
    %cst_23 = arith.constant dense<0.000000e+00> : vector<8x128xf32>
    %35 = tpu.matmul %33, %34, %cst_23 {dimension_numbers = #tpu.dot_dimension_numbers<[1], [0], [0], [1], [0, 0, 1, 1], [], []>} : vector<8x128xbf16>, vector<128x128xbf16>, vector<8x128xf32> -> vector<8x128xf32>
    %c4 = arith.constant 4 : index
    %c0_24 = arith.constant 0 : index
    %36 = vector.load %arg8[%c4, %c0_24] : memref<8x128xf32, #tpu.memory_space<vmem>>, vector<1x128xf32>
    %37 = vector.broadcast %36 : vector<1x128xf32> to vector<8x128xf32>
    %38 = arith.addf %35, %37 : vector<8x128xf32>
    %cst_25 = arith.constant 0.000000e+00 : f32
    %39 = vector.broadcast %cst_25 : f32 to vector<8x128xf32>
    %40 = arith.maximumf %38, %39 : vector<8x128xf32>
    %41 = arith.truncf %40 : vector<8x128xf32> to vector<8x128xbf16>
    %c0_26 = arith.constant 0 : index
    %c0_27 = arith.constant 0 : index
    %42 = vector.load %arg7[%c0_26, %c0_27] : memref<128x128xbf16, #tpu.memory_space<vmem>>, vector<128x128xbf16>
    %cst_28 = arith.constant dense<0.000000e+00> : vector<8x128xf32>
    %43 = tpu.matmul %41, %42, %cst_28 {dimension_numbers = #tpu.dot_dimension_numbers<[1], [0], [0], [1], [0, 0, 1, 1], [], []>} : vector<8x128xbf16>, vector<128x128xbf16>, vector<8x128xf32> -> vector<8x128xf32>
    %c5 = arith.constant 5 : index
    %c0_29 = arith.constant 0 : index
    %44 = vector.load %arg8[%c5, %c0_29] : memref<8x128xf32, #tpu.memory_space<vmem>>, vector<1x128xf32>
    %45 = vector.broadcast %44 : vector<1x128xf32> to vector<8x128xf32>
    %46 = arith.addf %43, %45 : vector<8x128xf32>
    %c0_30 = arith.constant 0 : index
    %c0_31 = arith.constant 0 : index
    %47 = vector.load %arg9[%c0_30, %c0_31] : memref<8x128xf32, #tpu.memory_space<vmem>>, vector<8x128xf32>
    tpu.vector_store %arg9[%c0_30, %c0_31], %46 {strides = array<i32>} : memref<8x128xf32, #tpu.memory_space<vmem>>, vector<8x128xf32>,
    return
  }
  func.func @transform_0(%arg0: i32) -> (i32, i32) {
    %c0_i32 = arith.constant 0 : i32
    %c0_i32_0 = arith.constant 0 : i32
    return %arg0, %c0_i32 : i32, i32
  }
  func.func @transform_1(%arg0: i32) -> (i32, i32) {
    %c0_i32 = arith.constant 0 : i32
    %c0_i32_0 = arith.constant 0 : i32
    %c0_i32_1 = arith.constant 0 : i32
    return %c0_i32, %c0_i32_0 : i32, i32
  }
  func.func @transform_2(%arg0: i32) -> (i32, i32) {
    %c0_i32 = arith.constant 0 : i32
    %c0_i32_0 = arith.constant 0 : i32
    %c0_i32_1 = arith.constant 0 : i32
    return %c0_i32, %c0_i32_0 : i32, i32
  }
  func.func @transform_3(%arg0: i32) -> (i32, i32) {
    %c0_i32 = arith.constant 0 : i32
    %c0_i32_0 = arith.constant 0 : i32
    %c0_i32_1 = arith.constant 0 : i32
    return %c0_i32, %c0_i32_0 : i32, i32
  }
  func.func @transform_4(%arg0: i32) -> (i32, i32) {
    %c0_i32 = arith.constant 0 : i32
    %c0_i32_0 = arith.constant 0 : i32
    %c0_i32_1 = arith.constant 0 : i32
    return %c0_i32, %c0_i32_0 : i32, i32
  }
  func.func @transform_5(%arg0: i32) -> (i32, i32) {
    %c0_i32 = arith.constant 0 : i32
    %c0_i32_0 = arith.constant 0 : i32
    %c0_i32_1 = arith.constant 0 : i32
    return %c0_i32, %c0_i32_0 : i32, i32
  }
  func.func @transform_6(%arg0: i32) -> (i32, i32) {
    %c0_i32 = arith.constant 0 : i32
    %c0_i32_0 = arith.constant 0 : i32
    %c0_i32_1 = arith.constant 0 : i32
    return %c0_i32, %c0_i32_0 : i32, i32
  }
  func.func @transform_7(%arg0: i32) -> (i32, i32) {
    %c0_i32 = arith.constant 0 : i32
    %c0_i32_0 = arith.constant 0 : i32
    %c0_i32_1 = arith.constant 0 : i32
    return %c0_i32, %c0_i32_0 : i32, i32
  }
  func.func @transform_8(%arg0: i32) -> (i32, i32) {
    %c0_i32 = arith.constant 0 : i32
    %c0_i32_0 = arith.constant 0 : i32
    return %arg0, %c0_i32 : i32, i32
  }
}

module attributes {stable_mosaic.version = 11 : i64} {
  func.func @_mlp_kernel(%arg0: i32, %arg1: memref<8x128xf32, #tpu.memory_space<vmem>>, %arg2: memref<128x128xbf16, #tpu.memory_space<vmem>>, %arg3: memref<128x128xbf16, #tpu.memory_space<vmem>>, %arg4: memref<128x128xbf16, #tpu.memory_space<vmem>>, %arg5: memref<128x128xbf16, #tpu.memory_space<vmem>>, %arg6: memref<128x128xbf16, #tpu.memory_space<vmem>>, %arg7: memref<128x128xbf16, #tpu.memory_space<vmem>>, %arg8: memref<8x128xf32, #tpu.memory_space<vmem>>, %arg9: memref<8x128xf32, #tpu.memory_space<vmem>>) attributes {dimension_semantics = [#tpu.dimension_semantics<parallel>], iteration_bounds = array<i64: 1>, scalar_prefetch = 0 : i64, scratch_operands = 0 : i64, tpu.core_type = #tpu.core_type<tc>, window_params = [{transform_indices = @transform_0, window_bounds = array<i64: 8, 128>}, {pipeline_mode = #tpu.pipeline_mode<synchronous>, transform_indices = @transform_1, window_bounds = array<i64: 128, 128>}, {pipeline_mode = #tpu.pipeline_mode<synchronous>, transform_indices = @transform_2, window_bounds = array<i64: 128, 128>}, {pipeline_mode = #tpu.pipeline_mode<synchronous>, transform_indices = @transform_3, window_bounds = array<i64: 128, 128>}, {pipeline_mode = #tpu.pipeline_mode<synchronous>, transform_indices = @transform_4, window_bounds = array<i64: 128, 128>}, {pipeline_mode = #tpu.pipeline_mode<synchronous>, transform_indices = @transform_5, window_bounds = array<i64: 128, 128>}, {pipeline_mode = #tpu.pipeline_mode<synchronous>, transform_indices = @transform_6, window_bounds = array<i64: 128, 128>}, {pipeline_mode = #tpu.pipeline_mode<synchronous>, transform_indices = @transform_7, window_bounds = array<i64: 8, 128>}, {transform_indices = @transform_8, window_bounds = array<i64: 8, 128>}]} {
    %c0 = arith.constant 0 : index
    %c0_0 = arith.constant 0 : index
    %0 = vector.load %arg1[%c0, %c0_0] : memref<8x128xf32, #tpu.memory_space<vmem>>, vector<8x128xf32>
    %1 = arith.truncf %0 : vector<8x128xf32> to vector<8x128xbf16>
    %c0_1 = arith.constant 0 : index
    %c0_2 = arith.constant 0 : index
    %2 = vector.load %arg2[%c0_1, %c0_2] : memref<128x128xbf16, #tpu.memory_space<vmem>>, vector<128x128xbf16>
    %cst = arith.constant dense<0.000000e+00> : vector<8x128xf32>
    %3 = tpu.matmul %1, %2, %cst {dimension_numbers = #tpu.dot_dimension_numbers<[1], [0], [0], [1], [0, 0, 1, 1], [], []>} : vector<8x128xbf16>, vector<128x128xbf16>, vector<8x128xf32> -> vector<8x128xf32>
    %c0_3 = arith.constant 0 : index
    %c0_4 = arith.constant 0 : index
    %4 = vector.load %arg8[%c0_3, %c0_4] : memref<8x128xf32, #tpu.memory_space<vmem>>, vector<1x128xf32>
    %5 = vector.broadcast %4 : vector<1x128xf32> to vector<8x128xf32>
    %6 = arith.addf %3, %5 : vector<8x128xf32>
    %cst_5 = arith.constant 0.000000e+00 : f32
    %7 = vector.broadcast %cst_5 : f32 to vector<8x128xf32>
    %8 = arith.maximumf %6, %7 : vector<8x128xf32>
    %9 = arith.truncf %8 : vector<8x128xf32> to vector<8x128xbf16>
    %c0_6 = arith.constant 0 : index
    %c0_7 = arith.constant 0 : index
    %10 = vector.load %arg3[%c0_6, %c0_7] : memref<128x128xbf16, #tpu.memory_space<vmem>>, vector<128x128xbf16>
    %cst_8 = arith.constant dense<0.000000e+00> : vector<8x128xf32>
    %11 = tpu.matmul %9, %10, %cst_8 {dimension_numbers = #tpu.dot_dimension_numbers<[1], [0], [0], [1], [0, 0, 1, 1], [], []>} : vector<8x128xbf16>, vector<128x128xbf16>, vector<8x128xf32> -> vector<8x128xf32>
    %c1 = arith.constant 1 : index
    %c0_9 = arith.constant 0 : index
    %12 = vector.load %arg8[%c1, %c0_9] : memref<8x128xf32, #tpu.memory_space<vmem>>, vector<1x128xf32>
    %13 = vector.broadcast %12 : vector<1x128xf32> to vector<8x128xf32>
    %14 = arith.addf %11, %13 : vector<8x128xf32>
    %cst_10 = arith.constant 0.000000e+00 : f32
    %15 = vector.broadcast %cst_10 : f32 to vector<8x128xf32>
    %16 = arith.maximumf %14, %15 : vector<8x128xf32>
    %17 = arith.truncf %16 : vector<8x128xf32> to vector<8x128xbf16>
    %c0_11 = arith.constant 0 : index
    %c0_12 = arith.constant 0 : index
    %18 = vector.load %arg4[%c0_11, %c0_12] : memref<128x128xbf16, #tpu.memory_space<vmem>>, vector<128x128xbf16>
    %cst_13 = arith.constant dense<0.000000e+00> : vector<8x128xf32>
    %19 = tpu.matmul %17, %18, %cst_13 {dimension_numbers = #tpu.dot_dimension_numbers<[1], [0], [0], [1], [0, 0, 1, 1], [], []>} : vector<8x128xbf16>, vector<128x128xbf16>, vector<8x128xf32> -> vector<8x128xf32>
    %c2 = arith.constant 2 : index
    %c0_14 = arith.constant 0 : index
    %20 = vector.load %arg8[%c2, %c0_14] : memref<8x128xf32, #tpu.memory_space<vmem>>, vector<1x128xf32>
    %21 = vector.broadcast %20 : vector<1x128xf32> to vector<8x128xf32>
    %22 = arith.addf %19, %21 : vector<8x128xf32>
    %cst_15 = arith.constant 0.000000e+00 : f32
    %23 = vector.broadcast %cst_15 : f32 to vector<8x128xf32>
    %24 = arith.maximumf %22, %23 : vector<8x128xf32>
    %25 = arith.truncf %24 : vector<8x128xf32> to vector<8x128xbf16>
    %c0_16 = arith.constant 0 : index
    %c0_17 = arith.constant 0 : index
    %26 = vector.load %arg5[%c0_16, %c0_17] : memref<128x128xbf16, #tpu.memory_space<vmem>>, vector<128x128xbf16>
    %cst_18 = arith.constant dense<0.000000e+00> : vector<8x128xf32>
    %27 = tpu.matmul %25, %26, %cst_18 {dimension_numbers = #tpu.dot_dimension_numbers<[1], [0], [0], [1], [0, 0, 1, 1], [], []>} : vector<8x128xbf16>, vector<128x128xbf16>, vector<8x128xf32> -> vector<8x128xf32>
    %c3 = arith.constant 3 : index
    %c0_19 = arith.constant 0 : index
    %28 = vector.load %arg8[%c3, %c0_19] : memref<8x128xf32, #tpu.memory_space<vmem>>, vector<1x128xf32>
    %29 = vector.broadcast %28 : vector<1x128xf32> to vector<8x128xf32>
    %30 = arith.addf %27, %29 : vector<8x128xf32>
    %cst_20 = arith.constant 0.000000e+00 : f32
    %31 = vector.broadcast %cst_20 : f32 to vector<8x128xf32>
    %32 = arith.maximumf %30, %31 : vector<8x128xf32>
    %33 = arith.truncf %32 : vector<8x128xf32> to vector<8x128xbf16>
    %c0_21 = arith.constant 0 : index
    %c0_22 = arith.constant 0 : index
    %34 = vector.load %arg6[%c0_21, %c0_22] : memref<128x128xbf16, #tpu.memory_space<vmem>>, vector<128x128xbf16>
    %cst_23 = arith.constant dense<0.000000e+00> : vector<8x128xf32>
    %35 = tpu.matmul %33, %34, %cst_23 {dimension_numbers = #tpu.dot_dimension_numbers<[1], [0], [0], [1], [0, 0, 1, 1], [], []>} : vector<8x128xbf16>, vector<128x128xbf16>, vector<8x128xf32> -> vector<8x128xf32>
    %c4 = arith.constant 4 : index
    %c0_24 = arith.constant 0 : index
    %36 = vector.load %arg8[%c4, %c0_24] : memref<8x128xf32, #tpu.memory_space<vmem>>, vector<1x128xf32>
    %37 = vector.broadcast %36 : vector<1x128xf32> to vector<8x128xf32>
    %38 = arith.addf %35, %37 : vector<8x128xf32>
    %cst_25 = arith.constant 0.000000e+00 : f32
    %39 = vector.broadcast %cst_25 : f32 to vector<8x128xf32>
    %40 = arith.maximumf %38, %39 : vector<8x128xf32>
    %41 = arith.truncf %40 : vector<8x128xf32> to vector<8x128xbf16>
    %c0_26 = arith.constant 0 : index
    %c0_27 = arith.constant 0 : index
    %42 = vector.load %arg7[%c0_26, %c0_27] : memref<128x128xbf16, #tpu.memory_space<vmem>>, vector<128x128xbf16>
    %cst_28 = arith.constant dense<0.000000e+00> : vector<8x128xf32>
    %43 = tpu.matmul %41, %42, %cst_28 {dimension_numbers = #tpu.dot_dimension_numbers<[1], [0], [0], [1], [0, 0, 1, 1], [], []>} : vector<8x128xbf16>, vector<128x128xbf16>, vector<8x128xf32> -> vector<8x128xf32>
    %c5 = arith.constant 5 : index
    %c0_29 = arith.constant 0 : index
    %44 = vector.load %arg8[%c5, %c0_29] : memref<8x128xf32, #tpu.memory_space<vmem>>, vector<1x128xf32>
    %45 = vector.broadcast %44 : vector<1x128xf32> to vector<8x128xf32>
    %46 = arith.addf %43, %45 : vector<8x128xf32>
    %c0_30 = arith.constant 0 : index
    %c0_31 = arith.constant 0 : index
    %47 = vector.load %arg9[%c0_30, %c0_31] : memref<8x128xf32, #tpu.memory_space<vmem>>, vector<8x128xf32>
    tpu.vector_store %arg9[%c0_30, %c0_31], %46 {strides = array<i32>} : memref<8x128xf32, #tpu.memory_space<vmem>>, vector<8x128xf32>,
    return
  }
  func.func @transform_0(%arg0: i32) -> (i32, i32) {
    %c0_i32 = arith.constant 0 : i32
    %c0_i32_0 = arith.constant 0 : i32
    return %arg0, %c0_i32 : i32, i32
  }
  func.func @transform_1(%arg0: i32) -> (i32, i32) {
    %c0_i32 = arith.constant 0 : i32
    %c0_i32_0 = arith.constant 0 : i32
    %c0_i32_1 = arith.constant 0 : i32
    return %c0_i32, %c0_i32_0 : i32, i32
  }
  func.func @transform_2(%arg0: i32) -> (i32, i32) {
    %c0_i32 = arith.constant 0 : i32
    %c0_i32_0 = arith.constant 0 : i32
    %c0_i32_1 = arith.constant 0 : i32
    return %c0_i32, %c0_i32_0 : i32, i32
  }
  func.func @transform_3(%arg0: i32) -> (i32, i32) {
    %c0_i32 = arith.constant 0 : i32
    %c0_i32_0 = arith.constant 0 : i32
    %c0_i32_1 = arith.constant 0 : i32
    return %c0_i32, %c0_i32_0 : i32, i32
  }
  func.func @transform_4(%arg0: i32) -> (i32, i32) {
    %c0_i32 = arith.constant 0 : i32
    %c0_i32_0 = arith.constant 0 : i32
    %c0_i32_1 = arith.constant 0 : i32
    return %c0_i32, %c0_i32_0 : i32, i32
  }
  func.func @transform_5(%arg0: i32) -> (i32, i32) {
    %c0_i32 = arith.constant 0 : i32
    %c0_i32_0 = arith.constant 0 : i32
    %c0_i32_1 = arith.constant 0 : i32
    return %c0_i32, %c0_i32_0 : i32, i32
  }
  func.func @transform_6(%arg0: i32) -> (i32, i32) {
    %c0_i32 = arith.constant 0 : i32
    %c0_i32_0 = arith.constant 0 : i32
    %c0_i32_1 = arith.constant 0 : i32
    return %c0_i32, %c0_i32_0 : i32, i32
  }
  func.func @transform_7(%arg0: i32) -> (i32, i32) {
    %c0_i32 = arith.constant 0 : i32
    %c0_i32_0 = arith.constant 0 : i32
    %c0_i32_1 = arith.constant 0 : i32
    return %c0_i32, %c0_i32_0 : i32, i32
  }
  func.func @transform_8(%arg0: i32) -> (i32, i32) {
    %c0_i32 = arith.constant 0 : i32
    %c0_i32_0 = arith.constant 0 : i32
    return %arg0, %c0_i32 : i32, i32
  }
}

</mosaic_0001>

<llo_original>
// kernel: tpu_custom_call.1
$region0: #{tpu_custom_call.1}
  #allocation0 [shape = 'u32[]', space=smem, size = 0x4, offset = 0x4, fixed_abs, tag = 'smem constant byte address 0x4 - core index']
  #allocation1 [shape = 'u32[72,128]{1,0:T(1,128)}', space=vmem, size = 0x9000, scoped, tag = 'internal scratch']
  %s0 = inlined_call_operand.hbm [shape: f32[8,128], index: 0, kind: input, shape index: {}]
  %s1 = inlined_call_operand.hbm [shape: bf16[128,128], index: 1, kind: input, shape index: {}]
  %s2 = inlined_call_operand.hbm [shape: bf16[128,128], index: 2, kind: input, shape index: {}]
  %s3 = inlined_call_operand.hbm [shape: bf16[128,128], index: 3, kind: input, shape index: {}]
  %s4 = inlined_call_operand.hbm [shape: bf16[128,128], index: 4, kind: input, shape index: {}]
  %s5 = inlined_call_operand.hbm [shape: bf16[128,128], index: 5, kind: input, shape index: {}]
  %s6 = inlined_call_operand.hbm [shape: bf16[128,128], index: 6, kind: input, shape index: {}]
  %s7 = inlined_call_operand.hbm [shape: f32[8,128], index: 7, kind: input, shape index: {}]
  %s8 = inlined_call_operand.hbm [shape: f32[8,128], index: 8, kind: output, shape index: {}]
  %s9 = sld [smem:[#allocation0]]
  $region74: #{tpu_custom_call.1} parent=0
    _
  %s11 = ssub.s32 1, %s9
  %s12 = scalar_select 0, %s11, %s9
  $region1: #{tpu_custom_call.1} parent=0
    #allocation2 [shape = 'u8[4096]{0}', space=vmem, size = 0x1000, scoped, tag = 'input window, operand 0, single buffered']
    #allocation3 [shape = 's32[1]{0}', space=sflag, size = 0x4, scoped, tag = 'scoped memory for tpu_custom_call.1']
    #allocation4 [shape = 's32[1]{0}', space=sflag, size = 0x4, scoped, tag = 'scoped memory for tpu_custom_call.1']
    #allocation5 [shape = 'u8[32768]{0}', space=vmem, size = 0x8000, scoped, tag = 'input window, operand 1, single buffered']
    #allocation6 [shape = 's32[1]{0}', space=sflag, size = 0x4, scoped, tag = 'scoped memory for tpu_custom_call.1']
    #allocation7 [shape = 'u8[32768]{0}', space=vmem, size = 0x8000, scoped, tag = 'input window, operand 2, single buffered']
    #allocation8 [shape = 'u8[32768]{0}', space=vmem, size = 0x8000, scoped, tag = 'input window, operand 3, single buffered']
    #allocation9 [shape = 's32[1]{0}', space=sflag, size = 0x4, scoped, tag = 'scoped memory for tpu_custom_call.1']
    #allocation10 [shape = 'u8[32768]{0}', space=vmem, size = 0x8000, scoped, tag = 'input window, operand 4, single buffered']
    #allocation11 [shape = 'u8[32768]{0}', space=vmem, size = 0x8000, scoped, tag = 'input window, operand 5, single buffered']
    #allocation12 [shape = 's32[1]{0}', space=sflag, size = 0x4, scoped, tag = 'scoped memory for tpu_custom_call.1']
    #allocation13 [shape = 'u8[32768]{0}', space=vmem, size = 0x8000, scoped, tag = 'input window, operand 6, single buffered']
    #allocation14 [shape = 'u8[4096]{0}', space=vmem, size = 0x1000, scoped, tag = 'input window, operand 7, single buffered']
    #allocation15 [shape = 's32[1]{0}', space=sflag, size = 0x4, scoped, tag = 'scoped memory for tpu_custom_call.1']
    #allocation16 [shape = 'u8[4096]{0}', space=vmem, size = 0x1000, scoped, tag = 'output window, operand 0, single buffered']
    %13 = vsyncpa [#allocation3], 0
    %14 = vsyncpa [#allocation6], 0
    %15 = vsyncpa [#allocation9], 0
    %16 = vsyncpa [#allocation12], 0
    %17 = vsyncpa [#allocation15], 0
    %18 = vsyncpa [#allocation4], 0
    // Predicated region
    $region2: #{tpu_custom_call.1} parent=1 // pred_check
      _
    $region3: #{tpu_custom_call.1} parent=1 // pred_check_branch
      %20 = sbr.rel (0) target = $region5
    $region4: #{tpu_custom_call.1} parent=1 // pred_region
      %22 = vsyncadd [#allocation3], 0
      %s24 = sshll.u32 %s0, 4
      %s25 = int_to_ptr.hbm [resolvable:$true] %s24
      %s26 = sshll.u32 [#allocation2], 4
      %s27 = int_to_ptr.vmem [resolvable:$true] %s26
      %29 = dma.hbm_to_vmem [thread:$0]  %s25, 128, %s27, [#allocation3]
    $region5: #{tpu_custom_call.1} parent=1 // pred_fallthru
      _
    // Predicated region
    $region6: #{tpu_custom_call.1} parent=1 // pred_check
      _
    $region7: #{tpu_custom_call.1} parent=1 // pred_check_branch
      %31 = sbr.rel (0) target = $region9
    $region8: #{tpu_custom_call.1} parent=1 // pred_region
      %33 = vsyncadd [#allocation6], 0
      %s34 = sshll.u32 %s1, 4
      %s35 = int_to_ptr.hbm [resolvable:$true] %s34
      %s36 = sshll.u32 [#allocation5], 4
      %s37 = int_to_ptr.vmem [resolvable:$true] %s36
      %42 = dma.hbm_to_vmem [thread:$0]  %s35, 1024, %s37, [#allocation6], 64, 64, 4
    $region9: #{tpu_custom_call.1} parent=1 // pred_fallthru
      _
    // Predicated region
    $region10: #{tpu_custom_call.1} parent=1 // pred_check
      _
    $region11: #{tpu_custom_call.1} parent=1 // pred_check_branch
      %44 = sbr.rel (0) target = $region13
    $region12: #{tpu_custom_call.1} parent=1 // pred_region
      %46 = vsyncadd [#allocation6], 0
      %s47 = sshll.u32 %s2, 4
      %s48 = int_to_ptr.hbm [resolvable:$true] %s47
      %s49 = sshll.u32 [#allocation7], 4
      %s50 = int_to_ptr.vmem [resolvable:$true] %s49
      %55 = dma.hbm_to_vmem [thread:$0]  %s48, 1024, %s50, [#allocation6], 64, 64, 4
    $region13: #{tpu_custom_call.1} parent=1 // pred_fallthru
      _
    // Predicated region
    $region14: #{tpu_custom_call.1} parent=1 // pred_check
      _
    $region15: #{tpu_custom_call.1} parent=1 // pred_check_branch
      %57 = sbr.rel (0) target = $region17
    $region16: #{tpu_custom_call.1} parent=1 // pred_region
      %59 = vsyncadd [#allocation9], 0
      %s60 = sshll.u32 %s3, 4
      %s61 = int_to_ptr.hbm [resolvable:$true] %s60
      %s62 = sshll.u32 [#allocation8], 4
      %s63 = int_to_ptr.vmem [resolvable:$true] %s62
      %68 = dma.hbm_to_vmem [thread:$0]  %s61, 1024, %s63, [#allocation9], 64, 64, 4
    $region17: #{tpu_custom_call.1} parent=1 // pred_fallthru
      _
    // Predicated region
    $region18: #{tpu_custom_call.1} parent=1 // pred_check
      _
    $region19: #{tpu_custom_call.1} parent=1 // pred_check_branch
      %70 = sbr.rel (0) target = $region21
    $region20: #{tpu_custom_call.1} parent=1 // pred_region
      %72 = vsyncadd [#allocation9], 0
      %s73 = sshll.u32 %s4, 4
      %s74 = int_to_ptr.hbm [resolvable:$true] %s73
      %s75 = sshll.u32 [#allocation10], 4
      %s76 = int_to_ptr.vmem [resolvable:$true] %s75
      %81 = dma.hbm_to_vmem [thread:$0]  %s74, 1024, %s76, [#allocation9], 64, 64, 4
    $region21: #{tpu_custom_call.1} parent=1 // pred_fallthru
      _
    // Predicated region
    $region22: #{tpu_custom_call.1} parent=1 // pred_check
      _
    $region23: #{tpu_custom_call.1} parent=1 // pred_check_branch
      %83 = sbr.rel (0) target = $region25
    $region24: #{tpu_custom_call.1} parent=1 // pred_region
      %85 = vsyncadd [#allocation12], 0
      %s86 = sshll.u32 %s5, 4
      %s87 = int_to_ptr.hbm [resolvable:$true] %s86
      %s88 = sshll.u32 [#allocation11], 4
      %s89 = int_to_ptr.vmem [resolvable:$true] %s88
      %94 = dma.hbm_to_vmem [thread:$0]  %s87, 1024, %s89, [#allocation12], 64, 64, 4
    $region25: #{tpu_custom_call.1} parent=1 // pred_fallthru
      _
    // Predicated region
    $region26: #{tpu_custom_call.1} parent=1 // pred_check
      _
    $region27: #{tpu_custom_call.1} parent=1 // pred_check_branch
      %96 = sbr.rel (0) target = $region29
    $region28: #{tpu_custom_call.1} parent=1 // pred_region
      %98 = vsyncadd [#allocation12], 0
      %s99 = sshll.u32 %s6, 4
      %s100 = int_to_ptr.hbm [resolvable:$true] %s99
      %s101 = sshll.u32 [#allocation13], 4
      %s102 = int_to_ptr.vmem [resolvable:$true] %s101
      %107 = dma.hbm_to_vmem [thread:$0]  %s100, 1024, %s102, [#allocation12], 64, 64, 4
    $region29: #{tpu_custom_call.1} parent=1 // pred_fallthru
      _
    // Predicated region
    $region30: #{tpu_custom_call.1} parent=1 // pred_check
      _
    $region31: #{tpu_custom_call.1} parent=1 // pred_check_branch
      %109 = sbr.rel (0) target = $region33
    $region32: #{tpu_custom_call.1} parent=1 // pred_region
      %111 = vsyncadd [#allocation15], 0
      %s113 = sshll.u32 %s7, 4
      %s114 = int_to_ptr.hbm [resolvable:$true] %s113
      %s115 = sshll.u32 [#allocation14], 4
      %s116 = int_to_ptr.vmem [resolvable:$true] %s115
      %118 = dma.hbm_to_vmem [thread:$0]  %s114, 128, %s116, [#allocation15]
    $region33: #{tpu_custom_call.1} parent=1 // pred_fallthru
      _
    // Predicated region
    $region34: #{tpu_custom_call.1} parent=1 // pred_check
      _
    $region35: #{tpu_custom_call.1} parent=1 // pred_check_branch
      %120 = sbr.rel (0) target = $region37
    $region36: #{tpu_custom_call.1} parent=1 // pred_region
      %122 = dma.done [#allocation3], 128
    $region37: #{tpu_custom_call.1} parent=1 // pred_fallthru
      _
    // Predicated region
    $region38: #{tpu_custom_call.1} parent=1 // pred_check
      _
    $region39: #{tpu_custom_call.1} parent=1 // pred_check_branch
      %124 = sbr.rel (0) target = $region41
    $region40: #{tpu_custom_call.1} parent=1 // pred_region
      %126 = dma.done [#allocation6], 1024
    $region41: #{tpu_custom_call.1} parent=1 // pred_fallthru
      _
    // Predicated region
    $region42: #{tpu_custom_call.1} parent=1 // pred_check
      _
    $region43: #{tpu_custom_call.1} parent=1 // pred_check_branch
      %128 = sbr.rel (0) target = $region45
    $region44: #{tpu_custom_call.1} parent=1 // pred_region
      %130 = dma.done [#allocation6], 1024
    $region45: #{tpu_custom_call.1} parent=1 // pred_fallthru
      _
    // Predicated region
    $region46: #{tpu_custom_call.1} parent=1 // pred_check
      _
    $region47: #{tpu_custom_call.1} parent=1 // pred_check_branch
      %132 = sbr.rel (0) target = $region49
    $region48: #{tpu_custom_call.1} parent=1 // pred_region
      %134 = dma.done [#allocation9], 1024
    $region49: #{tpu_custom_call.1} parent=1 // pred_fallthru
      _
    // Predicated region
    $region50: #{tpu_custom_call.1} parent=1 // pred_check
      _
    $region51: #{tpu_custom_call.1} parent=1 // pred_check_branch
      %136 = sbr.rel (0) target = $region53
    $region52: #{tpu_custom_call.1} parent=1 // pred_region
      %138 = dma.done [#allocation9], 1024
    $region53: #{tpu_custom_call.1} parent=1 // pred_fallthru
      _
    // Predicated region
    $region54: #{tpu_custom_call.1} parent=1 // pred_check
      _
    $region55: #{tpu_custom_call.1} parent=1 // pred_check_branch
      %140 = sbr.rel (0) target = $region57
    $region56: #{tpu_custom_call.1} parent=1 // pred_region
      %142 = dma.done [#allocation12], 1024
    $region57: #{tpu_custom_call.1} parent=1 // pred_fallthru
      _
    // Predicated region
    $region58: #{tpu_custom_call.1} parent=1 // pred_check
      _
    $region59: #{tpu_custom_call.1} parent=1 // pred_check_branch
      %144 = sbr.rel (0) target = $region61
    $region60: #{tpu_custom_call.1} parent=1 // pred_region
      %146 = dma.done [#allocation12], 1024
    $region61: #{tpu_custom_call.1} parent=1 // pred_fallthru
      _
    // Predicated region
    $region62: #{tpu_custom_call.1} parent=1 // pred_check
      _
    $region63: #{tpu_custom_call.1} parent=1 // pred_check_branch
      %148 = sbr.rel (0) target = $region65
    $region64: #{tpu_custom_call.1} parent=1 // pred_region
      %150 = dma.done [#allocation15], 128
    $region65: #{tpu_custom_call.1} parent=1 // pred_fallthru
      _
    %v151 = vld [vmem:[#allocation2] sm:$0xff]
    %v152 = vpack.c.bf16 %v151, %v151
    %v153 = vld [vmem:[#allocation5] sm:$0xf]
    %v154 = vld [vmem:[#allocation5 + $0x4] sm:$0xf]
    %v155 = vld [vmem:[#allocation5 + $0x8] sm:$0xf]
    %v156 = vld [vmem:[#allocation5 + $0xc] sm:$0xf]
    %v157 = vld [vmem:[#allocation5 + $0x10] sm:$0xf]
    %v158 = vld [vmem:[#allocation5 + $0x14] sm:$0xf]
    %v159 = vld [vmem:[#allocation5 + $0x18] sm:$0xf]
    %v160 = vld [vmem:[#allocation5 + $0x1c] sm:$0xf]
    %v161 = vld [vmem:[#allocation5 + $0x20] sm:$0xf]
    %v162 = vld [vmem:[#allocation5 + $0x24] sm:$0xf]
    %v163 = vld [vmem:[#allocation5 + $0x28] sm:$0xf]
    %v164 = vld [vmem:[#allocation5 + $0x2c] sm:$0xf]
    %v165 = vld [vmem:[#allocation5 + $0x30] sm:$0xf]
    %v166 = vld [vmem:[#allocation5 + $0x34] sm:$0xf]
    %v167 = vld [vmem:[#allocation5 + $0x38] sm:$0xf]
    %v168 = vld [vmem:[#allocation5 + $0x3c] sm:$0xf]
    %v169 = vld [vmem:[#allocation14] sm:$0x1]
    %v170 = vperm.slane %v169, 0
    %v187 = vunpack.c.l.b16 %v153
    %v188 = vunpack.c.l.b16 %v154
    %v189 = vunpack.c.l.b16 %v155
    %v190 = vunpack.c.l.b16 %v156
    %v191 = vunpack.c.l.b16 %v157
    %v192 = vunpack.c.l.b16 %v158
    %v193 = vunpack.c.l.b16 %v159
    %v194 = vunpack.c.l.b16 %v160
    %v195 = vunpack.c.l.b16 %v161
    %v196 = vunpack.c.l.b16 %v162
    %v197 = vunpack.c.l.b16 %v163
    %v198 = vunpack.c.l.b16 %v164
    %v199 = vunpack.c.l.b16 %v165
    %v200 = vunpack.c.l.b16 %v166
    %v201 = vunpack.c.l.b16 %v167
    %v202 = vunpack.c.l.b16 %v168
    %v203 = vpack.c.b16 %v188, %v187
    %v204 = vpack.c.b16 %v190, %v189
    %v205 = vpack.c.b16 %v192, %v191
    %v206 = vpack.c.b16 %v194, %v193
    %v207 = vpack.c.b16 %v196, %v195
    %v208 = vpack.c.b16 %v198, %v197
    %v209 = vpack.c.b16 %v200, %v199
    %v210 = vpack.c.b16 %v202, %v201
    %219 = vmatpush.bf16.msra.mxu0 %v210
    %220 = vmatpush.bf16.msra.mxu0 %v209
    %221 = vmatpush.bf16.msra.mxu0 %v208
    %222 = vmatpush.bf16.msra.mxu0 %v207
    %223 = vmatpush.bf16.msra.mxu0 %v206
    %224 = vmatpush.bf16.msra.mxu0 %v205
    %225 = vmatpush.bf16.msra.mxu0 %v204
    %226 = vmatpush.bf16.msra.mxu0 %v203
    %227 = vmatmul.bf16.gmra.mxu0 %v152
    %v228 = vpop.f32.mrf.mxu0
    %v229 = vadd.f32 %v170, %v228
    %v230 = vpop.f32.mrf.mxu0
    %231 = vdwg.mxu0
    %v232 = vmax.f32 %v229, 0.0
    %v233 = vpack.c.bf16 %v232, %v232
    %v234 = vld [vmem:[#allocation7] sm:$0xf]
    %v235 = vld [vmem:[#allocation7 + $0x4] sm:$0xf]
    %v236 = vld [vmem:[#allocation7 + $0x8] sm:$0xf]
    %v237 = vld [vmem:[#allocation7 + $0xc] sm:$0xf]
    %v238 = vld [vmem:[#allocation7 + $0x10] sm:$0xf]
    %v239 = vld [vmem:[#allocation7 + $0x14] sm:$0xf]
    %v240 = vld [vmem:[#allocation7 + $0x18] sm:$0xf]
    %v241 = vld [vmem:[#allocation7 + $0x1c] sm:$0xf]
    %v242 = vld [vmem:[#allocation7 + $0x20] sm:$0xf]
    %v243 = vld [vmem:[#allocation7 + $0x24] sm:$0xf]
    %v244 = vld [vmem:[#allocation7 + $0x28] sm:$0xf]
    %v245 = vld [vmem:[#allocation7 + $0x2c] sm:$0xf]
    %v246 = vld [vmem:[#allocation7 + $0x30] sm:$0xf]
    %v247 = vld [vmem:[#allocation7 + $0x34] sm:$0xf]
    %v248 = vld [vmem:[#allocation7 + $0x38] sm:$0xf]
    %v249 = vld [vmem:[#allocation7 + $0x3c] sm:$0xf]
    %v250 = vld [vmem:[#allocation14 + $0x1] sm:$0x1]
    %v251 = vperm.slane %v250, 0
    %v268 = vunpack.c.l.b16 %v234
    %v269 = vunpack.c.l.b16 %v235
    %v270 = vunpack.c.l.b16 %v236
    %v271 = vunpack.c.l.b16 %v237
    %v272 = vunpack.c.l.b16 %v238
    %v273 = vunpack.c.l.b16 %v239
    %v274 = vunpack.c.l.b16 %v240
    %v275 = vunpack.c.l.b16 %v241
    %v276 = vunpack.c.l.b16 %v242
    %v277 = vunpack.c.l.b16 %v243
    %v278 = vunpack.c.l.b16 %v244
    %v279 = vunpack.c.l.b16 %v245
    %v280 = vunpack.c.l.b16 %v246
    %v281 = vunpack.c.l.b16 %v247
    %v282 = vunpack.c.l.b16 %v248
    %v283 = vunpack.c.l.b16 %v249
    %v284 = vpack.c.b16 %v269, %v268
    %v285 = vpack.c.b16 %v271, %v270
    %v286 = vpack.c.b16 %v273, %v272
    %v287 = vpack.c.b16 %v275, %v274
    %v288 = vpack.c.b16 %v277, %v276
    %v289 = vpack.c.b16 %v279, %v278
    %v290 = vpack.c.b16 %v281, %v280
    %v291 = vpack.c.b16 %v283, %v282
    %300 = vmatpush.bf16.msra.mxu0 %v291
    %301 = vmatpush.bf16.msra.mxu0 %v290
    %302 = vmatpush.bf16.msra.mxu0 %v289
    %303 = vmatpush.bf16.msra.mxu0 %v288
    %304 = vmatpush.bf16.msra.mxu0 %v287
    %305 = vmatpush.bf16.msra.mxu0 %v286
    %306 = vmatpush.bf16.msra.mxu0 %v285
    %307 = vmatpush.bf16.msra.mxu0 %v284
    %308 = vmatmul.bf16.gmra.mxu0 %v233
    %v309 = vpop.f32.mrf.mxu0
    %v310 = vadd.f32 %v251, %v309
    %v311 = vpop.f32.mrf.mxu0
    %312 = vdwg.mxu0
    %v313 = vmax.f32 %v310, 0.0
    %v314 = vpack.c.bf16 %v313, %v313
    %v315 = vld [vmem:[#allocation8] sm:$0xf]
    %v316 = vld [vmem:[#allocation8 + $0x4] sm:$0xf]
    %v317 = vld [vmem:[#allocation8 + $0x8] sm:$0xf]
    %v318 = vld [vmem:[#allocation8 + $0xc] sm:$0xf]
    %v319 = vld [vmem:[#allocation8 + $0x10] sm:$0xf]
    %v320 = vld [vmem:[#allocation8 + $0x14] sm:$0xf]
    %v321 = vld [vmem:[#allocation8 + $0x18] sm:$0xf]
    %v322 = vld [vmem:[#allocation8 + $0x1c] sm:$0xf]
    %v323 = vld [vmem:[#allocation8 + $0x20] sm:$0xf]
    %v324 = vld [vmem:[#allocation8 + $0x24] sm:$0xf]
    %v325 = vld [vmem:[#allocation8 + $0x28] sm:$0xf]
    %v326 = vld [vmem:[#allocation8 + $0x2c] sm:$0xf]
    %v327 = vld [vmem:[#allocation8 + $0x30] sm:$0xf]
    %v328 = vld [vmem:[#allocation8 + $0x34] sm:$0xf]
    %v329 = vld [vmem:[#allocation8 + $0x38] sm:$0xf]
    %v330 = vld [vmem:[#allocation8 + $0x3c] sm:$0xf]
    %v331 = vld [vmem:[#allocation14 + $0x2] sm:$0x1]
    %v332 = vperm.slane %v331, 0
    %v349 = vunpack.c.l.b16 %v315
    %v350 = vunpack.c.l.b16 %v316
    %v351 = vunpack.c.l.b16 %v317
    %v352 = vunpack.c.l.b16 %v318
    %v353 = vunpack.c.l.b16 %v319
    %v354 = vunpack.c.l.b16 %v320
    %v355 = vunpack.c.l.b16 %v321
    %v356 = vunpack.c.l.b16 %v322
    %v357 = vunpack.c.l.b16 %v323
    %v358 = vunpack.c.l.b16 %v324
    %v359 = vunpack.c.l.b16 %v325
    %v360 = vunpack.c.l.b16 %v326
    %v361 = vunpack.c.l.b16 %v327
    %v362 = vunpack.c.l.b16 %v328
    %v363 = vunpack.c.l.b16 %v329
    %v364 = vunpack.c.l.b16 %v330
    %v365 = vpack.c.b16 %v350, %v349
    %v366 = vpack.c.b16 %v352, %v351
    %v367 = vpack.c.b16 %v354, %v353
    %v368 = vpack.c.b16 %v356, %v355
    %v369 = vpack.c.b16 %v358, %v357
    %v370 = vpack.c.b16 %v360, %v359
    %v371 = vpack.c.b16 %v362, %v361
    %v372 = vpack.c.b16 %v364, %v363
    %381 = vmatpush.bf16.msra.mxu0 %v372
    %382 = vmatpush.bf16.msra.mxu0 %v371
    %383 = vmatpush.bf16.msra.mxu0 %v370
    %384 = vmatpush.bf16.msra.mxu0 %v369
    %385 = vmatpush.bf16.msra.mxu0 %v368
    %386 = vmatpush.bf16.msra.mxu0 %v367
    %387 = vmatpush.bf16.msra.mxu0 %v366
    %388 = vmatpush.bf16.msra.mxu0 %v365
    %389 = vmatmul.bf16.gmra.mxu0 %v314
    %v390 = vpop.f32.mrf.mxu0
    %v391 = vadd.f32 %v332, %v390
    %v392 = vpop.f32.mrf.mxu0
    %393 = vdwg.mxu0
    %v394 = vmax.f32 %v391, 0.0
    %v395 = vpack.c.bf16 %v394, %v394
    %v396 = vld [vmem:[#allocation10] sm:$0xf]
    %v397 = vld [vmem:[#allocation10 + $0x4] sm:$0xf]
    %v398 = vld [vmem:[#allocation10 + $0x8] sm:$0xf]
    %v399 = vld [vmem:[#allocation10 + $0xc] sm:$0xf]
    %v400 = vld [vmem:[#allocation10 + $0x10] sm:$0xf]
    %v401 = vld [vmem:[#allocation10 + $0x14] sm:$0xf]
    %v402 = vld [vmem:[#allocation10 + $0x18] sm:$0xf]
    %v403 = vld [vmem:[#allocation10 + $0x1c] sm:$0xf]
    %v404 = vld [vmem:[#allocation10 + $0x20] sm:$0xf]
    %v405 = vld [vmem:[#allocation10 + $0x24] sm:$0xf]
    %v406 = vld [vmem:[#allocation10 + $0x28] sm:$0xf]
    %v407 = vld [vmem:[#allocation10 + $0x2c] sm:$0xf]
    %v408 = vld [vmem:[#allocation10 + $0x30] sm:$0xf]
    %v409 = vld [vmem:[#allocation10 + $0x34] sm:$0xf]
    %v410 = vld [vmem:[#allocation10 + $0x38] sm:$0xf]
    %v411 = vld [vmem:[#allocation10 + $0x3c] sm:$0xf]
    %v412 = vld [vmem:[#allocation14 + $0x3] sm:$0x1]
    %v413 = vperm.slane %v412, 0
    %v430 = vunpack.c.l.b16 %v396
    %v431 = vunpack.c.l.b16 %v397
    %v432 = vunpack.c.l.b16 %v398
    %v433 = vunpack.c.l.b16 %v399
    %v434 = vunpack.c.l.b16 %v400
    %v435 = vunpack.c.l.b16 %v401
    %v436 = vunpack.c.l.b16 %v402
    %v437 = vunpack.c.l.b16 %v403
    %v438 = vunpack.c.l.b16 %v404
    %v439 = vunpack.c.l.b16 %v405
    %v440 = vunpack.c.l.b16 %v406
    %v441 = vunpack.c.l.b16 %v407
    %v442 = vunpack.c.l.b16 %v408
    %v443 = vunpack.c.l.b16 %v409
    %v444 = vunpack.c.l.b16 %v410
    %v445 = vunpack.c.l.b16 %v411
    %v446 = vpack.c.b16 %v431, %v430
    %v447 = vpack.c.b16 %v433, %v432
    %v448 = vpack.c.b16 %v435, %v434
    %v449 = vpack.c.b16 %v437, %v436
    %v450 = vpack.c.b16 %v439, %v438
    %v451 = vpack.c.b16 %v441, %v440
    %v452 = vpack.c.b16 %v443, %v442
    %v453 = vpack.c.b16 %v445, %v444
    %462 = vmatpush.bf16.msra.mxu0 %v453
    %463 = vmatpush.bf16.msra.mxu0 %v452
    %464 = vmatpush.bf16.msra.mxu0 %v451
    %465 = vmatpush.bf16.msra.mxu0 %v450
    %466 = vmatpush.bf16.msra.mxu0 %v449
    %467 = vmatpush.bf16.msra.mxu0 %v448
    %468 = vmatpush.bf16.msra.mxu0 %v447
    %469 = vmatpush.bf16.msra.mxu0 %v446
    %470 = vmatmul.bf16.gmra.mxu0 %v395
    %v471 = vpop.f32.mrf.mxu0
    %v472 = vadd.f32 %v413, %v471
    %v473 = vpop.f32.mrf.mxu0
    %474 = vdwg.mxu0
    %v475 = vmax.f32 %v472, 0.0
    %v476 = vpack.c.bf16 %v475, %v475
    %v477 = vld [vmem:[#allocation11] sm:$0xf]
    %v478 = vld [vmem:[#allocation11 + $0x4] sm:$0xf]
    %v479 = vld [vmem:[#allocation11 + $0x8] sm:$0xf]
    %v480 = vld [vmem:[#allocation11 + $0xc] sm:$0xf]
    %v481 = vld [vmem:[#allocation11 + $0x10] sm:$0xf]
    %v482 = vld [vmem:[#allocation11 + $0x14] sm:$0xf]
    %v483 = vld [vmem:[#allocation11 + $0x18] sm:$0xf]
    %v484 = vld [vmem:[#allocation11 + $0x1c] sm:$0xf]
    %v485 = vld [vmem:[#allocation11 + $0x20] sm:$0xf]
    %v486 = vld [vmem:[#allocation11 + $0x24] sm:$0xf]
    %v487 = vld [vmem:[#allocation11 + $0x28] sm:$0xf]
    %v488 = vld [vmem:[#allocation11 + $0x2c] sm:$0xf]
    %v489 = vld [vmem:[#allocation11 + $0x30] sm:$0xf]
    %v490 = vld [vmem:[#allocation11 + $0x34] sm:$0xf]
    %v491 = vld [vmem:[#allocation11 + $0x38] sm:$0xf]
    %v492 = vld [vmem:[#allocation11 + $0x3c] sm:$0xf]
    %v493 = vld [vmem:[#allocation14 + $0x4] sm:$0x1]
    %v494 = vperm.slane %v493, 0
    %v511 = vunpack.c.l.b16 %v477
    %v512 = vunpack.c.l.b16 %v478
    %v513 = vunpack.c.l.b16 %v479
    %v514 = vunpack.c.l.b16 %v480
    %v515 = vunpack.c.l.b16 %v481
    %v516 = vunpack.c.l.b16 %v482
    %v517 = vunpack.c.l.b16 %v483
    %v518 = vunpack.c.l.b16 %v484
    %v519 = vunpack.c.l.b16 %v485
    %v520 = vunpack.c.l.b16 %v486
    %v521 = vunpack.c.l.b16 %v487
    %v522 = vunpack.c.l.b16 %v488
    %v523 = vunpack.c.l.b16 %v489
    %v524 = vunpack.c.l.b16 %v490
    %v525 = vunpack.c.l.b16 %v491
    %v526 = vunpack.c.l.b16 %v492
    %v527 = vpack.c.b16 %v512, %v511
    %v528 = vpack.c.b16 %v514, %v513
    %v529 = vpack.c.b16 %v516, %v515
    %v530 = vpack.c.b16 %v518, %v517
    %v531 = vpack.c.b16 %v520, %v519
    %v532 = vpack.c.b16 %v522, %v521
    %v533 = vpack.c.b16 %v524, %v523
    %v534 = vpack.c.b16 %v526, %v525
    %543 = vmatpush.bf16.msra.mxu0 %v534
    %544 = vmatpush.bf16.msra.mxu0 %v533
    %545 = vmatpush.bf16.msra.mxu0 %v532
    %546 = vmatpush.bf16.msra.mxu0 %v531
    %547 = vmatpush.bf16.msra.mxu0 %v530
    %548 = vmatpush.bf16.msra.mxu0 %v529
    %549 = vmatpush.bf16.msra.mxu0 %v528
    %550 = vmatpush.bf16.msra.mxu0 %v527
    %551 = vmatmul.bf16.gmra.mxu0 %v476
    %v552 = vpop.f32.mrf.mxu0
    %v553 = vadd.f32 %v494, %v552
    %v554 = vpop.f32.mrf.mxu0
    %555 = vdwg.mxu0
    %v556 = vmax.f32 %v553, 0.0
    %v557 = vpack.c.bf16 %v556, %v556
    %v558 = vld [vmem:[#allocation13] sm:$0xf]
    %v559 = vld [vmem:[#allocation13 + $0x4] sm:$0xf]
    %v560 = vld [vmem:[#allocation13 + $0x8] sm:$0xf]
    %v561 = vld [vmem:[#allocation13 + $0xc] sm:$0xf]
    %v562 = vld [vmem:[#allocation13 + $0x10] sm:$0xf]
    %v563 = vld [vmem:[#allocation13 + $0x14] sm:$0xf]
    %v564 = vld [vmem:[#allocation13 + $0x18] sm:$0xf]
    %v565 = vld [vmem:[#allocation13 + $0x1c] sm:$0xf]
    %v566 = vld [vmem:[#allocation13 + $0x20] sm:$0xf]
    %v567 = vld [vmem:[#allocation13 + $0x24] sm:$0xf]
    %v568 = vld [vmem:[#allocation13 + $0x28] sm:$0xf]
    %v569 = vld [vmem:[#allocation13 + $0x2c] sm:$0xf]
    %v570 = vld [vmem:[#allocation13 + $0x30] sm:$0xf]
    %v571 = vld [vmem:[#allocation13 + $0x34] sm:$0xf]
    %v572 = vld [vmem:[#allocation13 + $0x38] sm:$0xf]
    %v573 = vld [vmem:[#allocation13 + $0x3c] sm:$0xf]
    %v574 = vld [vmem:[#allocation14 + $0x5] sm:$0x1]
    %v575 = vperm.slane %v574, 0
    %v592 = vunpack.c.l.b16 %v558
    %v593 = vunpack.c.l.b16 %v559
    %v594 = vunpack.c.l.b16 %v560
    %v595 = vunpack.c.l.b16 %v561
    %v596 = vunpack.c.l.b16 %v562
    %v597 = vunpack.c.l.b16 %v563
    %v598 = vunpack.c.l.b16 %v564
    %v599 = vunpack.c.l.b16 %v565
    %v600 = vunpack.c.l.b16 %v566
    %v601 = vunpack.c.l.b16 %v567
    %v602 = vunpack.c.l.b16 %v568
    %v603 = vunpack.c.l.b16 %v569
    %v604 = vunpack.c.l.b16 %v570
    %v605 = vunpack.c.l.b16 %v571
    %v606 = vunpack.c.l.b16 %v572
    %v607 = vunpack.c.l.b16 %v573
    %v608 = vpack.c.b16 %v593, %v592
    %v609 = vpack.c.b16 %v595, %v594
    %v610 = vpack.c.b16 %v597, %v596
    %v611 = vpack.c.b16 %v599, %v598
    %v612 = vpack.c.b16 %v601, %v600
    %v613 = vpack.c.b16 %v603, %v602
    %v614 = vpack.c.b16 %v605, %v604
    %v615 = vpack.c.b16 %v607, %v606
    %624 = vmatpush.bf16.msra.mxu0 %v615
    %625 = vmatpush.bf16.msra.mxu0 %v614
    %626 = vmatpush.bf16.msra.mxu0 %v613
    %627 = vmatpush.bf16.msra.mxu0 %v612
    %628 = vmatpush.bf16.msra.mxu0 %v611
    %629 = vmatpush.bf16.msra.mxu0 %v610
    %630 = vmatpush.bf16.msra.mxu0 %v609
    %631 = vmatpush.bf16.msra.mxu0 %v608
    %632 = vmatmul.bf16.gmra.mxu0 %v557
    %v633 = vpop.f32.mrf.mxu0
    %v634 = vadd.f32 %v575, %v633
    %v635 = vpop.f32.mrf.mxu0
    %636 = vdwg.mxu0
    %637 = vst [vmem:[#allocation16] sm:$0xff] %v634
    // Predicated region
    $region66: #{tpu_custom_call.1} parent=1 // pred_check
      _
    $region67: #{tpu_custom_call.1} parent=1 // pred_check_branch
      %639 = sbr.rel (0) target = $region69
    $region68: #{tpu_custom_call.1} parent=1 // pred_region
      %641 = vsyncadd [#allocation4], 0
      %s643 = sshll.u32 [#allocation16], 4
      %s644 = int_to_ptr.vmem [resolvable:$true] %s643
      %s645 = sshll.u32 %s8, 4
      %s646 = int_to_ptr.hbm [resolvable:$true] %s645
      %648 = dma.vmem_to_hbm [thread:$0]  %s644, 128, %s646, [#allocation4]
    $region69: #{tpu_custom_call.1} parent=1 // pred_fallthru
      _
    // Predicated region
    $region70: #{tpu_custom_call.1} parent=1 // pred_check
      _
    $region71: #{tpu_custom_call.1} parent=1 // pred_check_branch
      %650 = sbr.rel (0) target = $region73
    $region72: #{tpu_custom_call.1} parent=1 // pred_region
      %652 = dma.done [#allocation4], 128
    $region73: #{tpu_custom_call.1} parent=1 // pred_fallthru
      _
    %653 = vsyncpa [#allocation3], 1
    %654 = vsyncpa [#allocation6], 1
    %655 = vsyncpa [#allocation9], 1
    %656 = vsyncpa [#allocation12], 1
    %657 = vsyncpa [#allocation15], 1
    %658 = vsyncpa [#allocation4], 1

// kernel: tpu_custom_call.1
$region0: #{tpu_custom_call.1}
  #allocation0 [shape = 'u32[]', space=smem, size = 0x4, offset = 0x4, fixed_abs, tag = 'smem constant byte address 0x4 - core index']
  #allocation1 [shape = 'u32[72,128]{1,0:T(1,128)}', space=vmem, size = 0x9000, scoped, tag = 'internal scratch']
  %s0 = inlined_call_operand.hbm [shape: f32[8,128], index: 0, kind: input, shape index: {}]
  %s1 = inlined_call_operand.hbm [shape: bf16[128,128], index: 1, kind: input, shape index: {}]
  %s2 = inlined_call_operand.hbm [shape: bf16[128,128], index: 2, kind: input, shape index: {}]
  %s3 = inlined_call_operand.hbm [shape: bf16[128,128], index: 3, kind: input, shape index: {}]
  %s4 = inlined_call_operand.hbm [shape: bf16[128,128], index: 4, kind: input, shape index: {}]
  %s5 = inlined_call_operand.hbm [shape: bf16[128,128], index: 5, kind: input, shape index: {}]
  %s6 = inlined_call_operand.hbm [shape: bf16[128,128], index: 6, kind: input, shape index: {}]
  %s7 = inlined_call_operand.hbm [shape: f32[8,128], index: 7, kind: input, shape index: {}]
  %s8 = inlined_call_operand.hbm [shape: f32[8,128], index: 8, kind: output, shape index: {}]
  %s9 = sld [smem:[#allocation0]]
  $region74: #{tpu_custom_call.1} parent=0
    _
  %s11 = ssub.s32 1, %s9
  %s12 = scalar_select 0, %s11, %s9
  $region1: #{tpu_custom_call.1} parent=0
    #allocation2 [shape = 'u8[4096]{0}', space=vmem, size = 0x1000, scoped, tag = 'input window, operand 0, single buffered']
    #allocation3 [shape = 's32[1]{0}', space=sflag, size = 0x4, scoped, tag = 'scoped memory for tpu_custom_call.1']
    #allocation4 [shape = 's32[1]{0}', space=sflag, size = 0x4, scoped, tag = 'scoped memory for tpu_custom_call.1']
    #allocation5 [shape = 'u8[32768]{0}', space=vmem, size = 0x8000, scoped, tag = 'input window, operand 1, single buffered']
    #allocation6 [shape = 's32[1]{0}', space=sflag, size = 0x4, scoped, tag = 'scoped memory for tpu_custom_call.1']
    #allocation7 [shape = 'u8[32768]{0}', space=vmem, size = 0x8000, scoped, tag = 'input window, operand 2, single buffered']
    #allocation8 [shape = 'u8[32768]{0}', space=vmem, size = 0x8000, scoped, tag = 'input window, operand 3, single buffered']
    #allocation9 [shape = 's32[1]{0}', space=sflag, size = 0x4, scoped, tag = 'scoped memory for tpu_custom_call.1']
    #allocation10 [shape = 'u8[32768]{0}', space=vmem, size = 0x8000, scoped, tag = 'input window, operand 4, single buffered']
    #allocation11 [shape = 'u8[32768]{0}', space=vmem, size = 0x8000, scoped, tag = 'input window, operand 5, single buffered']
    #allocation12 [shape = 's32[1]{0}', space=sflag, size = 0x4, scoped, tag = 'scoped memory for tpu_custom_call.1']
    #allocation13 [shape = 'u8[32768]{0}', space=vmem, size = 0x8000, scoped, tag = 'input window, operand 6, single buffered']
    #allocation14 [shape = 'u8[4096]{0}', space=vmem, size = 0x1000, scoped, tag = 'input window, operand 7, single buffered']
    #allocation15 [shape = 's32[1]{0}', space=sflag, size = 0x4, scoped, tag = 'scoped memory for tpu_custom_call.1']
    #allocation16 [shape = 'u8[4096]{0}', space=vmem, size = 0x1000, scoped, tag = 'output window, operand 0, single buffered']
    %13 = vsyncpa [#allocation3], 0
    %14 = vsyncpa [#allocation6], 0
    %15 = vsyncpa [#allocation9], 0
    %16 = vsyncpa [#allocation12], 0
    %17 = vsyncpa [#allocation15], 0
    %18 = vsyncpa [#allocation4], 0
    // Predicated region
    $region2: #{tpu_custom_call.1} parent=1 // pred_check
      _
    $region3: #{tpu_custom_call.1} parent=1 // pred_check_branch
      %20 = sbr.rel (0) target = $region5
    $region4: #{tpu_custom_call.1} parent=1 // pred_region
      %22 = vsyncadd [#allocation3], 0
      %s24 = sshll.u32 %s0, 4
      %s25 = int_to_ptr.hbm [resolvable:$true] %s24
      %s26 = sshll.u32 [#allocation2], 4
      %s27 = int_to_ptr.vmem [resolvable:$true] %s26
      %29 = dma.hbm_to_vmem [thread:$0]  %s25, 128, %s27, [#allocation3]
    $region5: #{tpu_custom_call.1} parent=1 // pred_fallthru
      _
    // Predicated region
    $region6: #{tpu_custom_call.1} parent=1 // pred_check
      _
    $region7: #{tpu_custom_call.1} parent=1 // pred_check_branch
      %31 = sbr.rel (0) target = $region9
    $region8: #{tpu_custom_call.1} parent=1 // pred_region
      %33 = vsyncadd [#allocation6], 0
      %s34 = sshll.u32 %s1, 4
      %s35 = int_to_ptr.hbm [resolvable:$true] %s34
      %s36 = sshll.u32 [#allocation5], 4
      %s37 = int_to_ptr.vmem [resolvable:$true] %s36
      %42 = dma.hbm_to_vmem [thread:$0]  %s35, 1024, %s37, [#allocation6], 64, 64, 4
    $region9: #{tpu_custom_call.1} parent=1 // pred_fallthru
      _
    // Predicated region
    $region10: #{tpu_custom_call.1} parent=1 // pred_check
      _
    $region11: #{tpu_custom_call.1} parent=1 // pred_check_branch
      %44 = sbr.rel (0) target = $region13
    $region12: #{tpu_custom_call.1} parent=1 // pred_region
      %46 = vsyncadd [#allocation6], 0
      %s47 = sshll.u32 %s2, 4
      %s48 = int_to_ptr.hbm [resolvable:$true] %s47
      %s49 = sshll.u32 [#allocation7], 4
      %s50 = int_to_ptr.vmem [resolvable:$true] %s49
      %55 = dma.hbm_to_vmem [thread:$0]  %s48, 1024, %s50, [#allocation6], 64, 64, 4
    $region13: #{tpu_custom_call.1} parent=1 // pred_fallthru
      _
    // Predicated region
    $region14: #{tpu_custom_call.1} parent=1 // pred_check
      _
    $region15: #{tpu_custom_call.1} parent=1 // pred_check_branch
      %57 = sbr.rel (0) target = $region17
    $region16: #{tpu_custom_call.1} parent=1 // pred_region
      %59 = vsyncadd [#allocation9], 0
      %s60 = sshll.u32 %s3, 4
      %s61 = int_to_ptr.hbm [resolvable:$true] %s60
      %s62 = sshll.u32 [#allocation8], 4
      %s63 = int_to_ptr.vmem [resolvable:$true] %s62
      %68 = dma.hbm_to_vmem [thread:$0]  %s61, 1024, %s63, [#allocation9], 64, 64, 4
    $region17: #{tpu_custom_call.1} parent=1 // pred_fallthru
      _
    // Predicated region
    $region18: #{tpu_custom_call.1} parent=1 // pred_check
      _
    $region19: #{tpu_custom_call.1} parent=1 // pred_check_branch
      %70 = sbr.rel (0) target = $region21
    $region20: #{tpu_custom_call.1} parent=1 // pred_region
      %72 = vsyncadd [#allocation9], 0
      %s73 = sshll.u32 %s4, 4
      %s74 = int_to_ptr.hbm [resolvable:$true] %s73
      %s75 = sshll.u32 [#allocation10], 4
      %s76 = int_to_ptr.vmem [resolvable:$true] %s75
      %81 = dma.hbm_to_vmem [thread:$0]  %s74, 1024, %s76, [#allocation9], 64, 64, 4
    $region21: #{tpu_custom_call.1} parent=1 // pred_fallthru
      _
    // Predicated region
    $region22: #{tpu_custom_call.1} parent=1 // pred_check
      _
    $region23: #{tpu_custom_call.1} parent=1 // pred_check_branch
      %83 = sbr.rel (0) target = $region25
    $region24: #{tpu_custom_call.1} parent=1 // pred_region
      %85 = vsyncadd [#allocation12], 0
      %s86 = sshll.u32 %s5, 4
      %s87 = int_to_ptr.hbm [resolvable:$true] %s86
      %s88 = sshll.u32 [#allocation11], 4
      %s89 = int_to_ptr.vmem [resolvable:$true] %s88
      %94 = dma.hbm_to_vmem [thread:$0]  %s87, 1024, %s89, [#allocation12], 64, 64, 4
    $region25: #{tpu_custom_call.1} parent=1 // pred_fallthru
      _
    // Predicated region
    $region26: #{tpu_custom_call.1} parent=1 // pred_check
      _
    $region27: #{tpu_custom_call.1} parent=1 // pred_check_branch
      %96 = sbr.rel (0) target = $region29
    $region28: #{tpu_custom_call.1} parent=1 // pred_region
      %98 = vsyncadd [#allocation12], 0
      %s99 = sshll.u32 %s6, 4
      %s100 = int_to_ptr.hbm [resolvable:$true] %s99
      %s101 = sshll.u32 [#allocation13], 4
      %s102 = int_to_ptr.vmem [resolvable:$true] %s101
      %107 = dma.hbm_to_vmem [thread:$0]  %s100, 1024, %s102, [#allocation12], 64, 64, 4
    $region29: #{tpu_custom_call.1} parent=1 // pred_fallthru
      _
    // Predicated region
    $region30: #{tpu_custom_call.1} parent=1 // pred_check
      _
    $region31: #{tpu_custom_call.1} parent=1 // pred_check_branch
      %109 = sbr.rel (0) target = $region33
    $region32: #{tpu_custom_call.1} parent=1 // pred_region
      %111 = vsyncadd [#allocation15], 0
      %s113 = sshll.u32 %s7, 4
      %s114 = int_to_ptr.hbm [resolvable:$true] %s113
      %s115 = sshll.u32 [#allocation14], 4
      %s116 = int_to_ptr.vmem [resolvable:$true] %s115
      %118 = dma.hbm_to_vmem [thread:$0]  %s114, 128, %s116, [#allocation15]
    $region33: #{tpu_custom_call.1} parent=1 // pred_fallthru
      _
    // Predicated region
    $region34: #{tpu_custom_call.1} parent=1 // pred_check
      _
    $region35: #{tpu_custom_call.1} parent=1 // pred_check_branch
      %120 = sbr.rel (0) target = $region37
    $region36: #{tpu_custom_call.1} parent=1 // pred_region
      %122 = dma.done [#allocation3], 128
    $region37: #{tpu_custom_call.1} parent=1 // pred_fallthru
      _
    // Predicated region
    $region38: #{tpu_custom_call.1} parent=1 // pred_check
      _
    $region39: #{tpu_custom_call.1} parent=1 // pred_check_branch
      %124 = sbr.rel (0) target = $region41
    $region40: #{tpu_custom_call.1} parent=1 // pred_region
      %126 = dma.done [#allocation6], 1024
    $region41: #{tpu_custom_call.1} parent=1 // pred_fallthru
      _
    // Predicated region
    $region42: #{tpu_custom_call.1} parent=1 // pred_check
      _
    $region43: #{tpu_custom_call.1} parent=1 // pred_check_branch
      %128 = sbr.rel (0) target = $region45
    $region44: #{tpu_custom_call.1} parent=1 // pred_region
      %130 = dma.done [#allocation6], 1024
    $region45: #{tpu_custom_call.1} parent=1 // pred_fallthru
      _
    // Predicated region
    $region46: #{tpu_custom_call.1} parent=1 // pred_check
      _
    $region47: #{tpu_custom_call.1} parent=1 // pred_check_branch
      %132 = sbr.rel (0) target = $region49
    $region48: #{tpu_custom_call.1} parent=1 // pred_region
      %134 = dma.done [#allocation9], 1024
    $region49: #{tpu_custom_call.1} parent=1 // pred_fallthru
      _
    // Predicated region
    $region50: #{tpu_custom_call.1} parent=1 // pred_check
      _
    $region51: #{tpu_custom_call.1} parent=1 // pred_check_branch
      %136 = sbr.rel (0) target = $region53
    $region52: #{tpu_custom_call.1} parent=1 // pred_region
      %138 = dma.done [#allocation9], 1024
    $region53: #{tpu_custom_call.1} parent=1 // pred_fallthru
      _
    // Predicated region
    $region54: #{tpu_custom_call.1} parent=1 // pred_check
      _
    $region55: #{tpu_custom_call.1} parent=1 // pred_check_branch
      %140 = sbr.rel (0) target = $region57
    $region56: #{tpu_custom_call.1} parent=1 // pred_region
      %142 = dma.done [#allocation12], 1024
    $region57: #{tpu_custom_call.1} parent=1 // pred_fallthru
      _
    // Predicated region
    $region58: #{tpu_custom_call.1} parent=1 // pred_check
      _
    $region59: #{tpu_custom_call.1} parent=1 // pred_check_branch
      %144 = sbr.rel (0) target = $region61
    $region60: #{tpu_custom_call.1} parent=1 // pred_region
      %146 = dma.done [#allocation12], 1024
    $region61: #{tpu_custom_call.1} parent=1 // pred_fallthru
      _
    // Predicated region
    $region62: #{tpu_custom_call.1} parent=1 // pred_check
      _
    $region63: #{tpu_custom_call.1} parent=1 // pred_check_branch
      %148 = sbr.rel (0) target = $region65
    $region64: #{tpu_custom_call.1} parent=1 // pred_region
      %150 = dma.done [#allocation15], 128
    $region65: #{tpu_custom_call.1} parent=1 // pred_fallthru
      _
    %v151 = vld [vmem:[#allocation2] sm:$0xff]
    %v152 = vpack.c.bf16 %v151, %v151
    %v153 = vld [vmem:[#allocation5] sm:$0xf]
    %v154 = vld [vmem:[#allocation5 + $0x4] sm:$0xf]
    %v155 = vld [vmem:[#allocation5 + $0x8] sm:$0xf]
    %v156 = vld [vmem:[#allocation5 + $0xc] sm:$0xf]
    %v157 = vld [vmem:[#allocation5 + $0x10] sm:$0xf]
    %v158 = vld [vmem:[#allocation5 + $0x14] sm:$0xf]
    %v159 = vld [vmem:[#allocation5 + $0x18] sm:$0xf]
    %v160 = vld [vmem:[#allocation5 + $0x1c] sm:$0xf]
    %v161 = vld [vmem:[#allocation5 + $0x20] sm:$0xf]
    %v162 = vld [vmem:[#allocation5 + $0x24] sm:$0xf]
    %v163 = vld [vmem:[#allocation5 + $0x28] sm:$0xf]
    %v164 = vld [vmem:[#allocation5 + $0x2c] sm:$0xf]
    %v165 = vld [vmem:[#allocation5 + $0x30] sm:$0xf]
    %v166 = vld [vmem:[#allocation5 + $0x34] sm:$0xf]
    %v167 = vld [vmem:[#allocation5 + $0x38] sm:$0xf]
    %v168 = vld [vmem:[#allocation5 + $0x3c] sm:$0xf]
    %v169 = vld [vmem:[#allocation14] sm:$0x1]
    %v170 = vperm.slane %v169, 0
    %v187 = vunpack.c.l.b16 %v153
    %v188 = vunpack.c.l.b16 %v154
    %v189 = vunpack.c.l.b16 %v155
    %v190 = vunpack.c.l.b16 %v156
    %v191 = vunpack.c.l.b16 %v157
    %v192 = vunpack.c.l.b16 %v158
    %v193 = vunpack.c.l.b16 %v159
    %v194 = vunpack.c.l.b16 %v160
    %v195 = vunpack.c.l.b16 %v161
    %v196 = vunpack.c.l.b16 %v162
    %v197 = vunpack.c.l.b16 %v163
    %v198 = vunpack.c.l.b16 %v164
    %v199 = vunpack.c.l.b16 %v165
    %v200 = vunpack.c.l.b16 %v166
    %v201 = vunpack.c.l.b16 %v167
    %v202 = vunpack.c.l.b16 %v168
    %v203 = vpack.c.b16 %v188, %v187
    %v204 = vpack.c.b16 %v190, %v189
    %v205 = vpack.c.b16 %v192, %v191
    %v206 = vpack.c.b16 %v194, %v193
    %v207 = vpack.c.b16 %v196, %v195
    %v208 = vpack.c.b16 %v198, %v197
    %v209 = vpack.c.b16 %v200, %v199
    %v210 = vpack.c.b16 %v202, %v201
    %219 = vmatpush.bf16.msra.mxu0 %v210
    %220 = vmatpush.bf16.msra.mxu0 %v209
    %221 = vmatpush.bf16.msra.mxu0 %v208
    %222 = vmatpush.bf16.msra.mxu0 %v207
    %223 = vmatpush.bf16.msra.mxu0 %v206
    %224 = vmatpush.bf16.msra.mxu0 %v205
    %225 = vmatpush.bf16.msra.mxu0 %v204
    %226 = vmatpush.bf16.msra.mxu0 %v203
    %227 = vmatmul.bf16.gmra.mxu0 %v152
    %v228 = vpop.f32.mrf.mxu0
    %v229 = vadd.f32 %v170, %v228
    %v230 = vpop.f32.mrf.mxu0
    %231 = vdwg.mxu0
    %v232 = vmax.f32 %v229, 0.0
    %v233 = vpack.c.bf16 %v232, %v232
    %v234 = vld [vmem:[#allocation7] sm:$0xf]
    %v235 = vld [vmem:[#allocation7 + $0x4] sm:$0xf]
    %v236 = vld [vmem:[#allocation7 + $0x8] sm:$0xf]
    %v237 = vld [vmem:[#allocation7 + $0xc] sm:$0xf]
    %v238 = vld [vmem:[#allocation7 + $0x10] sm:$0xf]
    %v239 = vld [vmem:[#allocation7 + $0x14] sm:$0xf]
    %v240 = vld [vmem:[#allocation7 + $0x18] sm:$0xf]
    %v241 = vld [vmem:[#allocation7 + $0x1c] sm:$0xf]
    %v242 = vld [vmem:[#allocation7 + $0x20] sm:$0xf]
    %v243 = vld [vmem:[#allocation7 + $0x24] sm:$0xf]
    %v244 = vld [vmem:[#allocation7 + $0x28] sm:$0xf]
    %v245 = vld [vmem:[#allocation7 + $0x2c] sm:$0xf]
    %v246 = vld [vmem:[#allocation7 + $0x30] sm:$0xf]
    %v247 = vld [vmem:[#allocation7 + $0x34] sm:$0xf]
    %v248 = vld [vmem:[#allocation7 + $0x38] sm:$0xf]
    %v249 = vld [vmem:[#allocation7 + $0x3c] sm:$0xf]
    %v250 = vld [vmem:[#allocation14 + $0x1] sm:$0x1]
    %v251 = vperm.slane %v250, 0
    %v268 = vunpack.c.l.b16 %v234
    %v269 = vunpack.c.l.b16 %v235
    %v270 = vunpack.c.l.b16 %v236
    %v271 = vunpack.c.l.b16 %v237
    %v272 = vunpack.c.l.b16 %v238
    %v273 = vunpack.c.l.b16 %v239
    %v274 = vunpack.c.l.b16 %v240
    %v275 = vunpack.c.l.b16 %v241
    %v276 = vunpack.c.l.b16 %v242
    %v277 = vunpack.c.l.b16 %v243
    %v278 = vunpack.c.l.b16 %v244
    %v279 = vunpack.c.l.b16 %v245
    %v280 = vunpack.c.l.b16 %v246
    %v281 = vunpack.c.l.b16 %v247
    %v282 = vunpack.c.l.b16 %v248
    %v283 = vunpack.c.l.b16 %v249
    %v284 = vpack.c.b16 %v269, %v268
    %v285 = vpack.c.b16 %v271, %v270
    %v286 = vpack.c.b16 %v273, %v272
    %v287 = vpack.c.b16 %v275, %v274
    %v288 = vpack.c.b16 %v277, %v276
    %v289 = vpack.c.b16 %v279, %v278
    %v290 = vpack.c.b16 %v281, %v280
    %v291 = vpack.c.b16 %v283, %v282
    %300 = vmatpush.bf16.msra.mxu0 %v291
    %301 = vmatpush.bf16.msra.mxu0 %v290
    %302 = vmatpush.bf16.msra.mxu0 %v289
    %303 = vmatpush.bf16.msra.mxu0 %v288
    %304 = vmatpush.bf16.msra.mxu0 %v287
    %305 = vmatpush.bf16.msra.mxu0 %v286
    %306 = vmatpush.bf16.msra.mxu0 %v285
    %307 = vmatpush.bf16.msra.mxu0 %v284
    %308 = vmatmul.bf16.gmra.mxu0 %v233
    %v309 = vpop.f32.mrf.mxu0
    %v310 = vadd.f32 %v251, %v309
    %v311 = vpop.f32.mrf.mxu0
    %312 = vdwg.mxu0
    %v313 = vmax.f32 %v310, 0.0
    %v314 = vpack.c.bf16 %v313, %v313
    %v315 = vld [vmem:[#allocation8] sm:$0xf]
    %v316 = vld [vmem:[#allocation8 + $0x4] sm:$0xf]
    %v317 = vld [vmem:[#allocation8 + $0x8] sm:$0xf]
    %v318 = vld [vmem:[#allocation8 + $0xc] sm:$0xf]
    %v319 = vld [vmem:[#allocation8 + $0x10] sm:$0xf]
    %v320 = vld [vmem:[#allocation8 + $0x14] sm:$0xf]
    %v321 = vld [vmem:[#allocation8 + $0x18] sm:$0xf]
    %v322 = vld [vmem:[#allocation8 + $0x1c] sm:$0xf]
    %v323 = vld [vmem:[#allocation8 + $0x20] sm:$0xf]
    %v324 = vld [vmem:[#allocation8 + $0x24] sm:$0xf]
    %v325 = vld [vmem:[#allocation8 + $0x28] sm:$0xf]
    %v326 = vld [vmem:[#allocation8 + $0x2c] sm:$0xf]
    %v327 = vld [vmem:[#allocation8 + $0x30] sm:$0xf]
    %v328 = vld [vmem:[#allocation8 + $0x34] sm:$0xf]
    %v329 = vld [vmem:[#allocation8 + $0x38] sm:$0xf]
    %v330 = vld [vmem:[#allocation8 + $0x3c] sm:$0xf]
    %v331 = vld [vmem:[#allocation14 + $0x2] sm:$0x1]
    %v332 = vperm.slane %v331, 0
    %v349 = vunpack.c.l.b16 %v315
    %v350 = vunpack.c.l.b16 %v316
    %v351 = vunpack.c.l.b16 %v317
    %v352 = vunpack.c.l.b16 %v318
    %v353 = vunpack.c.l.b16 %v319
    %v354 = vunpack.c.l.b16 %v320
    %v355 = vunpack.c.l.b16 %v321
    %v356 = vunpack.c.l.b16 %v322
    %v357 = vunpack.c.l.b16 %v323
    %v358 = vunpack.c.l.b16 %v324
    %v359 = vunpack.c.l.b16 %v325
    %v360 = vunpack.c.l.b16 %v326
    %v361 = vunpack.c.l.b16 %v327
    %v362 = vunpack.c.l.b16 %v328
    %v363 = vunpack.c.l.b16 %v329
    %v364 = vunpack.c.l.b16 %v330
    %v365 = vpack.c.b16 %v350, %v349
    %v366 = vpack.c.b16 %v352, %v351
    %v367 = vpack.c.b16 %v354, %v353
    %v368 = vpack.c.b16 %v356, %v355
    %v369 = vpack.c.b16 %v358, %v357
    %v370 = vpack.c.b16 %v360, %v359
    %v371 = vpack.c.b16 %v362, %v361
    %v372 = vpack.c.b16 %v364, %v363
    %381 = vmatpush.bf16.msra.mxu0 %v372
    %382 = vmatpush.bf16.msra.mxu0 %v371
    %383 = vmatpush.bf16.msra.mxu0 %v370
    %384 = vmatpush.bf16.msra.mxu0 %v369
    %385 = vmatpush.bf16.msra.mxu0 %v368
    %386 = vmatpush.bf16.msra.mxu0 %v367
    %387 = vmatpush.bf16.msra.mxu0 %v366
    %388 = vmatpush.bf16.msra.mxu0 %v365
    %389 = vmatmul.bf16.gmra.mxu0 %v314
    %v390 = vpop.f32.mrf.mxu0
    %v391 = vadd.f32 %v332, %v390
    %v392 = vpop.f32.mrf.mxu0
    %393 = vdwg.mxu0
    %v394 = vmax.f32 %v391, 0.0
    %v395 = vpack.c.bf16 %v394, %v394
    %v396 = vld [vmem:[#allocation10] sm:$0xf]
    %v397 = vld [vmem:[#allocation10 + $0x4] sm:$0xf]
    %v398 = vld [vmem:[#allocation10 + $0x8] sm:$0xf]
    %v399 = vld [vmem:[#allocation10 + $0xc] sm:$0xf]
    %v400 = vld [vmem:[#allocation10 + $0x10] sm:$0xf]
    %v401 = vld [vmem:[#allocation10 + $0x14] sm:$0xf]
    %v402 = vld [vmem:[#allocation10 + $0x18] sm:$0xf]
    %v403 = vld [vmem:[#allocation10 + $0x1c] sm:$0xf]
    %v404 = vld [vmem:[#allocation10 + $0x20] sm:$0xf]
    %v405 = vld [vmem:[#allocation10 + $0x24] sm:$0xf]
    %v406 = vld [vmem:[#allocation10 + $0x28] sm:$0xf]
    %v407 = vld [vmem:[#allocation10 + $0x2c] sm:$0xf]
    %v408 = vld [vmem:[#allocation10 + $0x30] sm:$0xf]
    %v409 = vld [vmem:[#allocation10 + $0x34] sm:$0xf]
    %v410 = vld [vmem:[#allocation10 + $0x38] sm:$0xf]
    %v411 = vld [vmem:[#allocation10 + $0x3c] sm:$0xf]
    %v412 = vld [vmem:[#allocation14 + $0x3] sm:$0x1]
    %v413 = vperm.slane %v412, 0
    %v430 = vunpack.c.l.b16 %v396
    %v431 = vunpack.c.l.b16 %v397
    %v432 = vunpack.c.l.b16 %v398
    %v433 = vunpack.c.l.b16 %v399
    %v434 = vunpack.c.l.b16 %v400
    %v435 = vunpack.c.l.b16 %v401
    %v436 = vunpack.c.l.b16 %v402
    %v437 = vunpack.c.l.b16 %v403
    %v438 = vunpack.c.l.b16 %v404
    %v439 = vunpack.c.l.b16 %v405
    %v440 = vunpack.c.l.b16 %v406
    %v441 = vunpack.c.l.b16 %v407
    %v442 = vunpack.c.l.b16 %v408
    %v443 = vunpack.c.l.b16 %v409
    %v444 = vunpack.c.l.b16 %v410
    %v445 = vunpack.c.l.b16 %v411
    %v446 = vpack.c.b16 %v431, %v430
    %v447 = vpack.c.b16 %v433, %v432
    %v448 = vpack.c.b16 %v435, %v434
    %v449 = vpack.c.b16 %v437, %v436
    %v450 = vpack.c.b16 %v439, %v438
    %v451 = vpack.c.b16 %v441, %v440
    %v452 = vpack.c.b16 %v443, %v442
    %v453 = vpack.c.b16 %v445, %v444
    %462 = vmatpush.bf16.msra.mxu0 %v453
    %463 = vmatpush.bf16.msra.mxu0 %v452
    %464 = vmatpush.bf16.msra.mxu0 %v451
    %465 = vmatpush.bf16.msra.mxu0 %v450
    %466 = vmatpush.bf16.msra.mxu0 %v449
    %467 = vmatpush.bf16.msra.mxu0 %v448
    %468 = vmatpush.bf16.msra.mxu0 %v447
    %469 = vmatpush.bf16.msra.mxu0 %v446
    %470 = vmatmul.bf16.gmra.mxu0 %v395
    %v471 = vpop.f32.mrf.mxu0
    %v472 = vadd.f32 %v413, %v471
    %v473 = vpop.f32.mrf.mxu0
    %474 = vdwg.mxu0
    %v475 = vmax.f32 %v472, 0.0
    %v476 = vpack.c.bf16 %v475, %v475
    %v477 = vld [vmem:[#allocation11] sm:$0xf]
    %v478 = vld [vmem:[#allocation11 + $0x4] sm:$0xf]
    %v479 = vld [vmem:[#allocation11 + $0x8] sm:$0xf]
    %v480 = vld [vmem:[#allocation11 + $0xc] sm:$0xf]
    %v481 = vld [vmem:[#allocation11 + $0x10] sm:$0xf]
    %v482 = vld [vmem:[#allocation11 + $0x14] sm:$0xf]
    %v483 = vld [vmem:[#allocation11 + $0x18] sm:$0xf]
    %v484 = vld [vmem:[#allocation11 + $0x1c] sm:$0xf]
    %v485 = vld [vmem:[#allocation11 + $0x20] sm:$0xf]
    %v486 = vld [vmem:[#allocation11 + $0x24] sm:$0xf]
    %v487 = vld [vmem:[#allocation11 + $0x28] sm:$0xf]
    %v488 = vld [vmem:[#allocation11 + $0x2c] sm:$0xf]
    %v489 = vld [vmem:[#allocation11 + $0x30] sm:$0xf]
    %v490 = vld [vmem:[#allocation11 + $0x34] sm:$0xf]
    %v491 = vld [vmem:[#allocation11 + $0x38] sm:$0xf]
    %v492 = vld [vmem:[#allocation11 + $0x3c] sm:$0xf]
    %v493 = vld [vmem:[#allocation14 + $0x4] sm:$0x1]
    %v494 = vperm.slane %v493, 0
    %v511 = vunpack.c.l.b16 %v477
    %v512 = vunpack.c.l.b16 %v478
    %v513 = vunpack.c.l.b16 %v479
    %v514 = vunpack.c.l.b16 %v480
    %v515 = vunpack.c.l.b16 %v481
    %v516 = vunpack.c.l.b16 %v482
    %v517 = vunpack.c.l.b16 %v483
    %v518 = vunpack.c.l.b16 %v484
    %v519 = vunpack.c.l.b16 %v485
    %v520 = vunpack.c.l.b16 %v486
    %v521 = vunpack.c.l.b16 %v487
    %v522 = vunpack.c.l.b16 %v488
    %v523 = vunpack.c.l.b16 %v489
    %v524 = vunpack.c.l.b16 %v490
    %v525 = vunpack.c.l.b16 %v491
    %v526 = vunpack.c.l.b16 %v492
    %v527 = vpack.c.b16 %v512, %v511
    %v528 = vpack.c.b16 %v514, %v513
    %v529 = vpack.c.b16 %v516, %v515
    %v530 = vpack.c.b16 %v518, %v517
    %v531 = vpack.c.b16 %v520, %v519
    %v532 = vpack.c.b16 %v522, %v521
    %v533 = vpack.c.b16 %v524, %v523
    %v534 = vpack.c.b16 %v526, %v525
    %543 = vmatpush.bf16.msra.mxu0 %v534
    %544 = vmatpush.bf16.msra.mxu0 %v533
    %545 = vmatpush.bf16.msra.mxu0 %v532
    %546 = vmatpush.bf16.msra.mxu0 %v531
    %547 = vmatpush.bf16.msra.mxu0 %v530
    %548 = vmatpush.bf16.msra.mxu0 %v529
    %549 = vmatpush.bf16.msra.mxu0 %v528
    %550 = vmatpush.bf16.msra.mxu0 %v527
    %551 = vmatmul.bf16.gmra.mxu0 %v476
    %v552 = vpop.f32.mrf.mxu0
    %v553 = vadd.f32 %v494, %v552
    %v554 = vpop.f32.mrf.mxu0
    %555 = vdwg.mxu0
    %v556 = vmax.f32 %v553, 0.0
    %v557 = vpack.c.bf16 %v556, %v556
    %v558 = vld [vmem:[#allocation13] sm:$0xf]
    %v559 = vld [vmem:[#allocation13 + $0x4] sm:$0xf]
    %v560 = vld [vmem:[#allocation13 + $0x8] sm:$0xf]
    %v561 = vld [vmem:[#allocation13 + $0xc] sm:$0xf]
    %v562 = vld [vmem:[#allocation13 + $0x10] sm:$0xf]
    %v563 = vld [vmem:[#allocation13 + $0x14] sm:$0xf]
    %v564 = vld [vmem:[#allocation13 + $0x18] sm:$0xf]
    %v565 = vld [vmem:[#allocation13 + $0x1c] sm:$0xf]
    %v566 = vld [vmem:[#allocation13 + $0x20] sm:$0xf]
    %v567 = vld [vmem:[#allocation13 + $0x24] sm:$0xf]
    %v568 = vld [vmem:[#allocation13 + $0x28] sm:$0xf]
    %v569 = vld [vmem:[#allocation13 + $0x2c] sm:$0xf]
    %v570 = vld [vmem:[#allocation13 + $0x30] sm:$0xf]
    %v571 = vld [vmem:[#allocation13 + $0x34] sm:$0xf]
    %v572 = vld [vmem:[#allocation13 + $0x38] sm:$0xf]
    %v573 = vld [vmem:[#allocation13 + $0x3c] sm:$0xf]
    %v574 = vld [vmem:[#allocation14 + $0x5] sm:$0x1]
    %v575 = vperm.slane %v574, 0
    %v592 = vunpack.c.l.b16 %v558
    %v593 = vunpack.c.l.b16 %v559
    %v594 = vunpack.c.l.b16 %v560
    %v595 = vunpack.c.l.b16 %v561
    %v596 = vunpack.c.l.b16 %v562
    %v597 = vunpack.c.l.b16 %v563
    %v598 = vunpack.c.l.b16 %v564
    %v599 = vunpack.c.l.b16 %v565
    %v600 = vunpack.c.l.b16 %v566
    %v601 = vunpack.c.l.b16 %v567
    %v602 = vunpack.c.l.b16 %v568
    %v603 = vunpack.c.l.b16 %v569
    %v604 = vunpack.c.l.b16 %v570
    %v605 = vunpack.c.l.b16 %v571
    %v606 = vunpack.c.l.b16 %v572
    %v607 = vunpack.c.l.b16 %v573
    %v608 = vpack.c.b16 %v593, %v592
    %v609 = vpack.c.b16 %v595, %v594
    %v610 = vpack.c.b16 %v597, %v596
    %v611 = vpack.c.b16 %v599, %v598
    %v612 = vpack.c.b16 %v601, %v600
    %v613 = vpack.c.b16 %v603, %v602
    %v614 = vpack.c.b16 %v605, %v604
    %v615 = vpack.c.b16 %v607, %v606
    %624 = vmatpush.bf16.msra.mxu0 %v615
    %625 = vmatpush.bf16.msra.mxu0 %v614
    %626 = vmatpush.bf16.msra.mxu0 %v613
    %627 = vmatpush.bf16.msra.mxu0 %v612
    %628 = vmatpush.bf16.msra.mxu0 %v611
    %629 = vmatpush.bf16.msra.mxu0 %v610
    %630 = vmatpush.bf16.msra.mxu0 %v609
    %631 = vmatpush.bf16.msra.mxu0 %v608
    %632 = vmatmul.bf16.gmra.mxu0 %v557
    %v633 = vpop.f32.mrf.mxu0
    %v634 = vadd.f32 %v575, %v633
    %v635 = vpop.f32.mrf.mxu0
    %636 = vdwg.mxu0
    %637 = vst [vmem:[#allocation16] sm:$0xff] %v634
    // Predicated region
    $region66: #{tpu_custom_call.1} parent=1 // pred_check
      _
    $region67: #{tpu_custom_call.1} parent=1 // pred_check_branch
      %639 = sbr.rel (0) target = $region69
    $region68: #{tpu_custom_call.1} parent=1 // pred_region
      %641 = vsyncadd [#allocation4], 0
      %s643 = sshll.u32 [#allocation16], 4
      %s644 = int_to_ptr.vmem [resolvable:$true] %s643
      %s645 = sshll.u32 %s8, 4
      %s646 = int_to_ptr.hbm [resolvable:$true] %s645
      %648 = dma.vmem_to_hbm [thread:$0]  %s644, 128, %s646, [#allocation4]
    $region69: #{tpu_custom_call.1} parent=1 // pred_fallthru
      _
    // Predicated region
    $region70: #{tpu_custom_call.1} parent=1 // pred_check
      _
    $region71: #{tpu_custom_call.1} parent=1 // pred_check_branch
      %650 = sbr.rel (0) target = $region73
    $region72: #{tpu_custom_call.1} parent=1 // pred_region
      %652 = dma.done [#allocation4], 128
    $region73: #{tpu_custom_call.1} parent=1 // pred_fallthru
      _
    %653 = vsyncpa [#allocation3], 1
    %654 = vsyncpa [#allocation6], 1
    %655 = vsyncpa [#allocation9], 1
    %656 = vsyncpa [#allocation12], 1
    %657 = vsyncpa [#allocation15], 1
    %658 = vsyncpa [#allocation4], 1

</llo_original>
